<compile_context>
chip_gen: v7x
topology: tpu7x:2x2x1
jax: 0.10.0
libtpu: 0.0.40
codegen_flags: <defaults>
</compile_context>

<pallas_src>
import functools
import math

import jax
import jax.numpy as jnp
from jax import lax
from jax.experimental import pallas as pl
from jax.experimental.pallas import tpu as pltpu

REF_PREC = jax.lax.Precision.HIGHEST   # used by the pure-JAX reference only


def _split_bf16(w):
    """One-time (trace-time) bf16 hi/lo split of an f32 weight."""
    w_hi = w.astype(jnp.bfloat16)
    w_lo = (w - w_hi.astype(jnp.float32)).astype(jnp.bfloat16)
    return w_hi, w_lo


def category_kernel(h_dim,
                    x_ref,
                    we_hi, we_lo, be,        # merged entry 1x1 convs (Cin,96)
                    wm_hi, wm_lo, bm,        # merged (3,1) convs, block-diag (192,64)
                    wc_hi, wc_lo, bc,        # branch2 second (3,1) conv (96,32)
                    wf_hi, wf_lo, bfin,      # final 1x1 conv (96,256)
                    o_ref):
    x = x_ref[...]                           # (rows, 256) f32, channels on lanes
    rows = x.shape[0]

    # h-boundary masks, computed ONCE per grid step and shared by both (3,1)
    # conv stages.  Row-tile starts are multiples of H, so h == local_row % H.
    hidx = lax.broadcasted_iota(jnp.int32, (rows, 1), 0) % h_dim
    not_top = (hidx != 0).astype(jnp.float32)            # kills in[h-1] at h == 0
    not_bot = (hidx != h_dim - 1).astype(jnp.float32)    # kills in[h+1] at h == H-1

    mm = lambda u, v: jnp.dot(u, v, preferred_element_type=jnp.float32)

    def dot2(a_bf16, w_hi_ref, w_lo_ref):
        # bf16 LHS -> its lo term is identically zero, so 2 MXU passes cover
        # the full f32 weight precision (pre-split hi/lo pair).
        return mm(a_bf16, w_hi_ref[...]) + mm(a_bf16, w_lo_ref[...])

    def shifted_cat(v):
        # [v[h-1] | v[h] | v[h+1]] concatenated on lanes, zeroed at the H
        # boundaries.  Rolls ride the XLU slot; single bf16 cast at the end.
        up = pltpu.roll(v, shift=1, axis=0) * not_top
        dn = pltpu.roll(v, shift=rows - 1, axis=0) * not_bot   # circular == -1
        return jnp.concatenate([up, v, dn], axis=1).astype(jnp.bfloat16)

    # ---- merged branch-entry 1x1 convs: one (rows,Cin)x(Cin,96) matmul -----
    # x is f32 from HBM -> 3-pass bf16 split (~ lax.Precision.HIGH), f32 acc.
    x_hi = x.astype(jnp.bfloat16)
    x_lo = (x - x_hi.astype(jnp.float32)).astype(jnp.bfloat16)
    t = mm(x_hi, we_hi[...]) + mm(x_lo, we_hi[...]) + mm(x_hi, we_lo[...])
    t = jnp.maximum(t + be[...], 0.0)        # (rows, 96) = [branch1|branch2|branch0]
    y0 = t[:, 64:96]                         # branch0 output (1x1 conv only)

    # ---- merged (3,1) convs: branch1 + branch2's first, block-diag weight --
    z = jnp.maximum(dot2(shifted_cat(t[:, 0:64]), wm_hi, wm_lo) + bm[...], 0.0)
    y1 = z[:, 0:32]                          # branch1 output

    # ---- branch2's second (3,1) conv ----------------------------------------
    y2 = jnp.maximum(dot2(shifted_cat(z[:, 32:64]), wc_hi, wc_lo) + bc[...], 0.0)

    # ---- final 1x1 conv on the lane-concat of branch outputs + residual ----
    ycat = jnp.concatenate([y0, y1, y2], axis=1).astype(jnp.bfloat16)   # (rows, 96)
    xcat = dot2(ycat, wf_hi, wf_lo) + bfin[...]

    # residual + relu (requires in_channels == 256, as in the PyTorch module)
    o_ref[...] = jnp.maximum(x + xcat, 0.0).astype(o_ref.dtype)


def _pick_block_rows(total_rows, h, target, min_grid=4):
    """Largest row tile that is a multiple of 8 sublanes and of H (so the
    h-boundary masks stay valid and rolls never leak across images/columns),
    divides the flattened row count, is <= target, and leaves >= min_grid grid
    steps when possible (>= 2 pipelined steps per core on megacore v5e/v6e and
    on v7x's two TensorCores, so per-tile DMA is hidden)."""
    unit = (8 * h) // math.gcd(8, h)
    cands = [r for r in range(unit, total_rows + 1, unit) if total_rows % r == 0]
    if not cands:
        raise ValueError(
            f"flattened rows N*W*H={total_rows} must be a multiple of lcm(8, H)={unit}")
    pref = [r for r in cands if r <= target and total_rows // r >= min_grid]
    if pref:
        return max(pref)
    ok = [r for r in cands if r <= target]
    return max(ok) if ok else cands[0]


def _const_spec(a):
    # Full-array block, same block for every grid step (weights stay resident).
    return pl.BlockSpec(a.shape, lambda i, nd=a.ndim: (0,) * nd)


def category_forward_rows(x_rows, params, h_dim, *, block_rows_target=4096,
                          out_dtype=jnp.float32):
    """Core entry point: x_rows is (N*W*H, C) with h fastest along rows and
    channels on the last (lane) axis.  No transposes anywhere on this path."""
    rows, c = x_rows.shape
    assert c == 256, "residual x + conv(cat) requires in_channels == 256"
    assert rows % h_dim == 0

    (w0, b0, w1a, b1a, w1b, b1b, w2a, b2a, w2b, b2b, w2c, b2c, wf, bf) = params

    # --- one-time (trace-time) weight fusion + bf16 hi/lo pre-split ---------
    # Entry 1x1 convs merged; lane order [branch1 | branch2 | branch0] so the
    # downstream (3,1)-conv input is the lane-offset-0 slice.
    we = jnp.concatenate([w1a, w2a, w0], axis=1)          # (Cin, 96)
    be = jnp.concatenate([b1a, b2a, b0], axis=1)          # (1, 96)

    # branch1 (3,1) conv + branch2 first (3,1) conv merged as a block-diagonal
    # (192, 64) weight.  cat lane layout: [up_b1|up_b2|mid_b1|mid_b2|dn_b1|dn_b2].
    z32 = jnp.zeros((32, 32), jnp.float32)
    wm = jnp.concatenate([
        jnp.concatenate([w1b[0], z32], axis=1),
        jnp.concatenate([z32, w2b[0]], axis=1),
        jnp.concatenate([w1b[1], z32], axis=1),
        jnp.concatenate([z32, w2b[1]], axis=1),
        jnp.concatenate([w1b[2], z32], axis=1),
        jnp.concatenate([z32, w2b[2]], axis=1),
    ], axis=0)                                            # (192, 64)
    bm = jnp.concatenate([b1b, b2b], axis=1)              # (1, 64)

    wc = w2c.reshape(96, 32)                              # branch2 second (3,1)
    wff = wf.reshape(96, 256)                             # final 96 -> 256

    we_hi, we_lo = _split_bf16(we)
    wm_hi, wm_lo = _split_bf16(wm)
    wc_hi, wc_lo = _split_bf16(wc)
    wf_hi, wf_lo = _split_bf16(wff)

    fused = (we_hi, we_lo, be,
             wm_hi, wm_lo, bm,
             wc_hi, wc_lo, b2c,
             wf_hi, wf_lo, bf)

    br = _pick_block_rows(rows, h_dim, block_rows_target)
    # Roll/mask boundary correctness depends on every row tile starting at a
    # multiple of H (and being a multiple of 8 sublanes).
    assert br % h_dim == 0 and br % 8 == 0 and rows % br == 0, (br, h_dim, rows)
    grid = (rows // br,)

    return pl.pallas_call(
        functools.partial(category_kernel, h_dim),
        out_shape=jax.ShapeDtypeStruct((rows, 256), out_dtype),
        grid=grid,
        in_specs=[pl.BlockSpec((br, c), lambda i: (i, 0))]
                 + [_const_spec(p) for p in fused],
        out_specs=pl.BlockSpec((br, 256), lambda i: (i, 0)),
        compiler_params=pltpu.CompilerParams(
            dimension_semantics=("parallel",),
            # Sized for v7x's 64 MiB physical VMEM; plenty on v5e/v6e (128 MiB).
            vmem_limit_bytes=48 * 1024 * 1024,
        ),
    )(x_rows, *fused)


def category_forward(x_nchw, params, *, block_rows_target=4096,
                     out_dtype=jnp.float32):
    """NCHW adapter (PyTorch layout).  In a channels-last-resident model these
    two transpose passes disappear (use category_forward_rows directly)."""
    n, c, h, w = x_nchw.shape
    # NCHW -> (N, W, H, C) -> (N*W*H, C): h fastest along rows, C on lanes.
    x_rows = jnp.transpose(x_nchw, (0, 3, 2, 1)).reshape(n * w * h, c)
    out = category_forward_rows(x_rows, params, h,
                                block_rows_target=block_rows_target,
                                out_dtype=out_dtype)
    return jnp.transpose(out.reshape(n, w, h, 256), (0, 3, 2, 1))


def init_params(key, cin):
    """Deterministic synthetic params; BN (eval mode) folded into conv weights."""
    eps = 1e-5
    keys = iter(jax.random.split(key, 64))

    def conv_bn(cin_, cout, taps=None):
        shape = (cin_, cout) if taps is None else (taps, cin_, cout)
        w = jax.random.normal(next(keys), shape, jnp.float32) * 0.05
        b = jax.random.normal(next(keys), (cout,), jnp.float32) * 0.05
        gamma = jax.random.uniform(next(keys), (cout,), jnp.float32, 0.5, 1.5)
        beta = jax.random.normal(next(keys), (cout,), jnp.float32) * 0.05
        mean = jax.random.normal(next(keys), (cout,), jnp.float32) * 0.05
        var = jax.random.uniform(next(keys), (cout,), jnp.float32, 0.5, 1.5)
        scale = gamma / jnp.sqrt(var + eps)
        return w * scale, ((b - mean) * scale + beta).reshape(1, cout)

    w0, b0 = conv_bn(cin, 32)
    w1a, b1a = conv_bn(cin, 32)
    w1b, b1b = conv_bn(32, 32, taps=3)
    w2a, b2a = conv_bn(cin, 32)
    w2b, b2b = conv_bn(32, 32, taps=3)
    w2c, b2c = conv_bn(32, 32, taps=3)
    # final conv: plain 96->256 1x1 with bias (no BN / no relu), stored as (3,32,256)
    wf = jax.random.normal(next(keys), (3, 32, 256), jnp.float32) * 0.05
    bf = (jax.random.normal(next(keys), (256,), jnp.float32) * 0.05).reshape(1, 256)
    return (w0, b0, w1a, b1a, w1b, b1b, w2a, b2a, w2b, b2b, w2c, b2c, wf, bf)


def reference(x_nchw, params):
    """Independent pure-JAX reference (unfused convs, f32 HIGHEST precision)."""
    (w0, b0, w1a, b1a, w1b, b1b, w2a, b2a, w2b, b2b, w2c, b2c, wf, bf) = params
    dn = ('NCHW', 'OIHW', 'NCHW')

    def conv1x1(x, w, b, relu=True):
        wo = jnp.transpose(w, (1, 0))[:, :, None, None]
        y = lax.conv_general_dilated(x, wo, (1, 1), ((0, 0), (0, 0)),
                                     dimension_numbers=dn, precision=REF_PREC)
        y = y + b.reshape(1, -1, 1, 1)
        return jnp.maximum(y, 0.0) if relu else y

    def conv31(x, w, b):
        wo = jnp.transpose(w, (2, 1, 0))[:, :, :, None]   # (cout, cin, 3, 1)
        y = lax.conv_general_dilated(x, wo, (1, 1), ((1, 1), (0, 0)),
                                     dimension_numbers=dn, precision=REF_PREC)
        return jnp.maximum(y + b.reshape(1, -1, 1, 1), 0.0)

    y0 = conv1x1(x_nchw, w0, b0)
    y1 = conv31(conv1x1(x_nchw, w1a, b1a), w1b, b1b)
    y2 = conv31(conv31(conv1x1(x_nchw, w2a, b2a), w2b, b2b), w2c, b2c)
    xcat = jnp.concatenate([y0, y1, y2], axis=1)
    wf_full = jnp.concatenate([wf[0], wf[1], wf[2]], axis=0)   # (96, 256)
    xcat = conv1x1(xcat, wf_full, bf, relu=False)
    return jnp.maximum(x_nchw + xcat, 0.0)


if __name__ == "__main__":
    key = jax.random.PRNGKey(0)
    kx, kp = jax.random.split(key)
    # residual (x + x_cat) requires in_channels == 256
    N, C, H, W = 2, 256, 8, 8
    x = jax.random.normal(kx, (N, C, H, W), jnp.float32)
    params = init_params(kp, C)

    out = jax.block_until_ready(jax.jit(category_forward)(x, params))
    ref = jax.block_until_ready(reference(x, params))

    assert out.shape == (N, 256, H, W), out.shape
    err = float(jnp.max(jnp.abs(out - ref)))
    assert err < 5e-3, f"max abs err {err}"
    print("KERNEL_OK")
</pallas_src>

<mosaic_0001>
module attributes {stable_mosaic.version = 11 : i64} {
  func.func @category_kernel(%arg0: i32, %arg1: memref<32x256xf32, #tpu.memory_space<vmem>>, %arg2: memref<256x96xbf16, #tpu.memory_space<vmem>>, %arg3: memref<256x96xbf16, #tpu.memory_space<vmem>>, %arg4: memref<1x96xf32, #tpu.memory_space<vmem>>, %arg5: memref<192x64xbf16, #tpu.memory_space<vmem>>, %arg6: memref<192x64xbf16, #tpu.memory_space<vmem>>, %arg7: memref<1x64xf32, #tpu.memory_space<vmem>>, %arg8: memref<96x32xbf16, #tpu.memory_space<vmem>>, %arg9: memref<96x32xbf16, #tpu.memory_space<vmem>>, %arg10: memref<1x32xf32, #tpu.memory_space<vmem>>, %arg11: memref<96x256xbf16, #tpu.memory_space<vmem>>, %arg12: memref<96x256xbf16, #tpu.memory_space<vmem>>, %arg13: memref<1x256xf32, #tpu.memory_space<vmem>>, %arg14: memref<32x256xf32, #tpu.memory_space<vmem>>) attributes {dimension_semantics = [#tpu.dimension_semantics<parallel>], iteration_bounds = array<i64: 4>, scalar_prefetch = 0 : i64, scratch_operands = 0 : i64, tpu.core_type = #tpu.core_type<tc>, window_params = [{transform_indices = @transform_0, window_bounds = array<i64: 32, 256>}, {pipeline_mode = #tpu.pipeline_mode<synchronous>, transform_indices = @transform_1, window_bounds = array<i64: 256, 96>}, {pipeline_mode = #tpu.pipeline_mode<synchronous>, transform_indices = @transform_2, window_bounds = array<i64: 256, 96>}, {pipeline_mode = #tpu.pipeline_mode<synchronous>, transform_indices = @transform_3, window_bounds = array<i64: 1, 96>}, {pipeline_mode = #tpu.pipeline_mode<synchronous>, transform_indices = @transform_4, window_bounds = array<i64: 192, 64>}, {pipeline_mode = #tpu.pipeline_mode<synchronous>, transform_indices = @transform_5, window_bounds = array<i64: 192, 64>}, {pipeline_mode = #tpu.pipeline_mode<synchronous>, transform_indices = @transform_6, window_bounds = array<i64: 1, 64>}, {pipeline_mode = #tpu.pipeline_mode<synchronous>, transform_indices = @transform_7, window_bounds = array<i64: 96, 32>}, {pipeline_mode = #tpu.pipeline_mode<synchronous>, transform_indices = @transform_8, window_bounds = array<i64: 96, 32>}, {pipeline_mode = #tpu.pipeline_mode<synchronous>, transform_indices = @transform_9, window_bounds = array<i64: 1, 32>}, {pipeline_mode = #tpu.pipeline_mode<synchronous>, transform_indices = @transform_10, window_bounds = array<i64: 96, 256>}, {pipeline_mode = #tpu.pipeline_mode<synchronous>, transform_indices = @transform_11, window_bounds = array<i64: 96, 256>}, {pipeline_mode = #tpu.pipeline_mode<synchronous>, transform_indices = @transform_12, window_bounds = array<i64: 1, 256>}, {transform_indices = @transform_13, window_bounds = array<i64: 32, 256>}]} {
    %c0 = arith.constant 0 : index
    %c0_0 = arith.constant 0 : index
    %0 = vector.load %arg1[%c0, %c0_0] : memref<32x256xf32, #tpu.memory_space<vmem>>, vector<32x256xf32>
    %1 = tpu.iota {dimensions = array<i32: 0>} : vector<32x1xi32>
    %c8_i32 = arith.constant 8 : i32
    %c0_i32 = arith.constant 0 : i32
    %2 = arith.cmpi eq, %c8_i32, %c0_i32 : i32
    %c1_i32 = arith.constant 1 : i32
    %3 = arith.select %2, %c1_i32, %c8_i32 : i32
    %4 = vector.broadcast %3 : i32 to vector<32x1xi32>
    %5 = arith.remsi %1, %4 : vector<32x1xi32>
    %c0_i32_1 = arith.constant 0 : i32
    %6 = vector.broadcast %c0_i32_1 : i32 to vector<32x1xi32>
    %7 = arith.cmpi ne, %5, %6 : vector<32x1xi32>
    %c0_i32_2 = arith.constant 0 : i32
    %8 = vector.broadcast %c0_i32_2 : i32 to vector<32x1xi32>
    %9 = arith.cmpi slt, %5, %8 : vector<32x1xi32>
    %c0_i32_3 = arith.constant 0 : i32
    %10 = arith.cmpi slt, %3, %c0_i32_3 : i32
    %11 = vector.broadcast %10 : i1 to vector<32x1xi1>
    %12 = vector.broadcast %11 : vector<32x1xi1> to vector<32x1xi1>
    %13 = arith.xori %9, %12 : vector<32x1xi1>
    %14 = arith.andi %13, %7 : vector<32x1xi1>
    %15 = vector.broadcast %3 : i32 to vector<32x1xi32>
    %16 = arith.addi %5, %15 : vector<32x1xi32>
    %17 = arith.select %14, %16, %5 : vector<32x1xi1>, vector<32x1xi32>
    %c0_i32_4 = arith.constant 0 : i32
    %18 = vector.broadcast %c0_i32_4 : i32 to vector<32x1xi32>
    %19 = arith.cmpi ne, %17, %18 : vector<32x1xi32>
    %20 = arith.extui %19 : vector<32x1xi1> to vector<32x1xi32>
    %21 = arith.sitofp %20 : vector<32x1xi32> to vector<32x1xf32>
    %c7_i32 = arith.constant 7 : i32
    %22 = vector.broadcast %c7_i32 : i32 to vector<32x1xi32>
    %23 = arith.cmpi ne, %17, %22 : vector<32x1xi32>
    %24 = arith.extui %23 : vector<32x1xi1> to vector<32x1xi32>
    %25 = arith.sitofp %24 : vector<32x1xi32> to vector<32x1xf32>
    %26 = arith.truncf %0 : vector<32x256xf32> to vector<32x256xbf16>
    %27 = arith.extf %26 : vector<32x256xbf16> to vector<32x256xf32>
    %28 = arith.subf %0, %27 : vector<32x256xf32>
    %29 = arith.truncf %28 : vector<32x256xf32> to vector<32x256xbf16>
    %c0_5 = arith.constant 0 : index
    %c0_6 = arith.constant 0 : index
    %30 = vector.load %arg2[%c0_5, %c0_6] : memref<256x96xbf16, #tpu.memory_space<vmem>>, vector<256x96xbf16>
    %cst = arith.constant dense<0.000000e+00> : vector<32x96xf32>
    %31 = tpu.matmul %26, %30, %cst {dimension_numbers = #tpu.dot_dimension_numbers<[1], [0], [0], [1], [0, 0, 1, 1], [], []>} : vector<32x256xbf16>, vector<256x96xbf16>, vector<32x96xf32> -> vector<32x96xf32>
    %c0_7 = arith.constant 0 : index
    %c0_8 = arith.constant 0 : index
    %32 = vector.load %arg2[%c0_7, %c0_8] : memref<256x96xbf16, #tpu.memory_space<vmem>>, vector<256x96xbf16>
    %cst_9 = arith.constant dense<0.000000e+00> : vector<32x96xf32>
    %33 = tpu.matmul %29, %32, %cst_9 {dimension_numbers = #tpu.dot_dimension_numbers<[1], [0], [0], [1], [0, 0, 1, 1], [], []>} : vector<32x256xbf16>, vector<256x96xbf16>, vector<32x96xf32> -> vector<32x96xf32>
    %34 = arith.addf %31, %33 : vector<32x96xf32>
    %c0_10 = arith.constant 0 : index
    %c0_11 = arith.constant 0 : index
    %35 = vector.load %arg3[%c0_10, %c0_11] : memref<256x96xbf16, #tpu.memory_space<vmem>>, vector<256x96xbf16>
    %cst_12 = arith.constant dense<0.000000e+00> : vector<32x96xf32>
    %36 = tpu.matmul %26, %35, %cst_12 {dimension_numbers = #tpu.dot_dimension_numbers<[1], [0], [0], [1], [0, 0, 1, 1], [], []>} : vector<32x256xbf16>, vector<256x96xbf16>, vector<32x96xf32> -> vector<32x96xf32>
    %37 = arith.addf %34, %36 : vector<32x96xf32>
    %c0_13 = arith.constant 0 : index
    %c0_14 = arith.constant 0 : index
    %38 = vector.load %arg4[%c0_13, %c0_14] : memref<1x96xf32, #tpu.memory_space<vmem>>, vector<1x96xf32>
    %39 = vector.broadcast %38 : vector<1x96xf32> to vector<32x96xf32>
    %40 = arith.addf %37, %39 : vector<32x96xf32>
    %cst_15 = arith.constant 0.000000e+00 : f32
    %41 = vector.broadcast %cst_15 : f32 to vector<32x96xf32>
    %42 = arith.maximumf %40, %41 : vector<32x96xf32>
    %43 = vector.extract_strided_slice %42 {offsets = [0, 64], sizes = [32, 32], strides = [1, 1]} : vector<32x96xf32> to vector<32x32xf32>
    %44 = vector.extract_strided_slice %42 {offsets = [0, 0], sizes = [32, 64], strides = [1, 1]} : vector<32x96xf32> to vector<32x64xf32>
    %c1_i32_16 = arith.constant 1 : i32
    %45 = tpu.dynamic_rotate %44 by %c1_i32_16 dim 0 : vector<32x64xf32>, i32 -> vector<32x64xf32>
    %46 = vector.broadcast %21 : vector<32x1xf32> to vector<32x64xf32>
    %47 = arith.mulf %45, %46 : vector<32x64xf32>
    %c31_i32 = arith.constant 31 : i32
    %48 = tpu.dynamic_rotate %44 by %c31_i32 dim 0 : vector<32x64xf32>, i32 -> vector<32x64xf32>
    %49 = vector.broadcast %25 : vector<32x1xf32> to vector<32x64xf32>
    %50 = arith.mulf %48, %49 : vector<32x64xf32>
    %51 = tpu.concatenate %47, %44, %50 in 1 : vector<32x64xf32>, vector<32x64xf32>, vector<32x64xf32> -> vector<32x192xf32>
    %52 = arith.truncf %51 : vector<32x192xf32> to vector<32x192xbf16>
    %c0_17 = arith.constant 0 : index
    %c0_18 = arith.constant 0 : index
    %53 = vector.load %arg5[%c0_17, %c0_18] : memref<192x64xbf16, #tpu.memory_space<vmem>>, vector<192x64xbf16>
    %cst_19 = arith.constant dense<0.000000e+00> : vector<32x64xf32>
    %54 = tpu.matmul %52, %53, %cst_19 {dimension_numbers = #tpu.dot_dimension_numbers<[1], [0], [0], [1], [0, 0, 1, 1], [], []>} : vector<32x192xbf16>, vector<192x64xbf16>, vector<32x64xf32> -> vector<32x64xf32>
    %c0_20 = arith.constant 0 : index
    %c0_21 = arith.constant 0 : index
    %55 = vector.load %arg6[%c0_20, %c0_21] : memref<192x64xbf16, #tpu.memory_space<vmem>>, vector<192x64xbf16>
    %cst_22 = arith.constant dense<0.000000e+00> : vector<32x64xf32>
    %56 = tpu.matmul %52, %55, %cst_22 {dimension_numbers = #tpu.dot_dimension_numbers<[1], [0], [0], [1], [0, 0, 1, 1], [], []>} : vector<32x192xbf16>, vector<192x64xbf16>, vector<32x64xf32> -> vector<32x64xf32>
    %57 = arith.addf %54, %56 : vector<32x64xf32>
    %c0_23 = arith.constant 0 : index
    %c0_24 = arith.constant 0 : index
    %58 = vector.load %arg7[%c0_23, %c0_24] : memref<1x64xf32, #tpu.memory_space<vmem>>, vector<1x64xf32>
    %59 = vector.broadcast %58 : vector<1x64xf32> to vector<32x64xf32>
    %60 = arith.addf %57, %59 : vector<32x64xf32>
    %cst_25 = arith.constant 0.000000e+00 : f32
    %61 = vector.broadcast %cst_25 : f32 to vector<32x64xf32>
    %62 = arith.maximumf %60, %61 : vector<32x64xf32>
    %63 = vector.extract_strided_slice %62 {offsets = [0, 0], sizes = [32, 32], strides = [1, 1]} : vector<32x64xf32> to vector<32x32xf32>
    %64 = vector.extract_strided_slice %62 {offsets = [0, 32], sizes = [32, 32], strides = [1, 1]} : vector<32x64xf32> to vector<32x32xf32>
    %c1_i32_26 = arith.constant 1 : i32
    %65 = tpu.dynamic_rotate %64 by %c1_i32_26 dim 0 : vector<32x32xf32>, i32 -> vector<32x32xf32>
    %66 = vector.broadcast %21 : vector<32x1xf32> to vector<32x32xf32>
    %67 = arith.mulf %65, %66 : vector<32x32xf32>
    %c31_i32_27 = arith.constant 31 : i32
    %68 = tpu.dynamic_rotate %64 by %c31_i32_27 dim 0 : vector<32x32xf32>, i32 -> vector<32x32xf32>
    %69 = vector.broadcast %25 : vector<32x1xf32> to vector<32x32xf32>
    %70 = arith.mulf %68, %69 : vector<32x32xf32>
    %71 = tpu.concatenate %67, %64, %70 in 1 : vector<32x32xf32>, vector<32x32xf32>, vector<32x32xf32> -> vector<32x96xf32>
    %72 = arith.truncf %71 : vector<32x96xf32> to vector<32x96xbf16>
    %c0_28 = arith.constant 0 : index
    %c0_29 = arith.constant 0 : index
    %73 = vector.load %arg8[%c0_28, %c0_29] : memref<96x32xbf16, #tpu.memory_space<vmem>>, vector<96x32xbf16>
    %cst_30 = arith.constant dense<0.000000e+00> : vector<32x32xf32>
    %74 = tpu.matmul %72, %73, %cst_30 {dimension_numbers = #tpu.dot_dimension_numbers<[1], [0], [0], [1], [0, 0, 1, 1], [], []>} : vector<32x96xbf16>, vector<96x32xbf16>, vector<32x32xf32> -> vector<32x32xf32>
    %c0_31 = arith.constant 0 : index
    %c0_32 = arith.constant 0 : index
    %75 = vector.load %arg9[%c0_31, %c0_32] : memref<96x32xbf16, #tpu.memory_space<vmem>>, vector<96x32xbf16>
    %cst_33 = arith.constant dense<0.000000e+00> : vector<32x32xf32>
    %76 = tpu.matmul %72, %75, %cst_33 {dimension_numbers = #tpu.dot_dimension_numbers<[1], [0], [0], [1], [0, 0, 1, 1], [], []>} : vector<32x96xbf16>, vector<96x32xbf16>, vector<32x32xf32> -> vector<32x32xf32>
    %77 = arith.addf %74, %76 : vector<32x32xf32>
    %c0_34 = arith.constant 0 : index
    %c0_35 = arith.constant 0 : index
    %78 = vector.load %arg10[%c0_34, %c0_35] : memref<1x32xf32, #tpu.memory_space<vmem>>, vector<1x32xf32>
    %79 = vector.broadcast %78 : vector<1x32xf32> to vector<32x32xf32>
    %80 = arith.addf %77, %79 : vector<32x32xf32>
    %cst_36 = arith.constant 0.000000e+00 : f32
    %81 = vector.broadcast %cst_36 : f32 to vector<32x32xf32>
    %82 = arith.maximumf %80, %81 : vector<32x32xf32>
    %83 = tpu.concatenate %43, %63, %82 in 1 : vector<32x32xf32>, vector<32x32xf32>, vector<32x32xf32> -> vector<32x96xf32>
    %84 = arith.truncf %83 : vector<32x96xf32> to vector<32x96xbf16>
    %c0_37 = arith.constant 0 : index
    %c0_38 = arith.constant 0 : index
    %85 = vector.load %arg11[%c0_37, %c0_38] : memref<96x256xbf16, #tpu.memory_space<vmem>>, vector<96x256xbf16>
    %cst_39 = arith.constant dense<0.000000e+00> : vector<32x256xf32>
    %86 = tpu.matmul %84, %85, %cst_39 {dimension_numbers = #tpu.dot_dimension_numbers<[1], [0], [0], [1], [0, 0, 1, 1], [], []>} : vector<32x96xbf16>, vector<96x256xbf16>, vector<32x256xf32> -> vector<32x256xf32>
    %c0_40 = arith.constant 0 : index
    %c0_41 = arith.constant 0 : index
    %87 = vector.load %arg12[%c0_40, %c0_41] : memref<96x256xbf16, #tpu.memory_space<vmem>>, vector<96x256xbf16>
    %cst_42 = arith.constant dense<0.000000e+00> : vector<32x256xf32>
    %88 = tpu.matmul %84, %87, %cst_42 {dimension_numbers = #tpu.dot_dimension_numbers<[1], [0], [0], [1], [0, 0, 1, 1], [], []>} : vector<32x96xbf16>, vector<96x256xbf16>, vector<32x256xf32> -> vector<32x256xf32>
    %89 = arith.addf %86, %88 : vector<32x256xf32>
    %c0_43 = arith.constant 0 : index
    %c0_44 = arith.constant 0 : index
    %90 = vector.load %arg13[%c0_43, %c0_44] : memref<1x256xf32, #tpu.memory_space<vmem>>, vector<1x256xf32>
    %91 = vector.broadcast %90 : vector<1x256xf32> to vector<32x256xf32>
    %92 = arith.addf %89, %91 : vector<32x256xf32>
    %93 = arith.addf %0, %92 : vector<32x256xf32>
    %cst_45 = arith.constant 0.000000e+00 : f32
    %94 = vector.broadcast %cst_45 : f32 to vector<32x256xf32>
    %95 = arith.maximumf %93, %94 : vector<32x256xf32>
    %c0_46 = arith.constant 0 : index
    %c0_47 = arith.constant 0 : index
    %96 = vector.load %arg14[%c0_46, %c0_47] : memref<32x256xf32, #tpu.memory_space<vmem>>, vector<32x256xf32>
    tpu.vector_store %arg14[%c0_46, %c0_47], %95 {strides = array<i32>} : memref<32x256xf32, #tpu.memory_space<vmem>>, vector<32x256xf32>,
    return
  }
  func.func @transform_0(%arg0: i32) -> (i32, i32) {
    %c0_i32 = arith.constant 0 : i32
    %c0_i32_0 = arith.constant 0 : i32
    return %arg0, %c0_i32 : i32, i32
  }
  func.func @transform_1(%arg0: i32) -> (i32, i32) {
    %c0_i32 = arith.constant 0 : i32
    %c0_i32_0 = arith.constant 0 : i32
    %c0_i32_1 = arith.constant 0 : i32
    return %c0_i32, %c0_i32_0 : i32, i32
  }
  func.func @transform_2(%arg0: i32) -> (i32, i32) {
    %c0_i32 = arith.constant 0 : i32
    %c0_i32_0 = arith.constant 0 : i32
    %c0_i32_1 = arith.constant 0 : i32
    return %c0_i32, %c0_i32_0 : i32, i32
  }
  func.func @transform_3(%arg0: i32) -> (i32, i32) {
    %c0_i32 = arith.constant 0 : i32
    %c0_i32_0 = arith.constant 0 : i32
    %c0_i32_1 = arith.constant 0 : i32
    return %c0_i32, %c0_i32_0 : i32, i32
  }
  func.func @transform_4(%arg0: i32) -> (i32, i32) {
    %c0_i32 = arith.constant 0 : i32
    %c0_i32_0 = arith.constant 0 : i32
    %c0_i32_1 = arith.constant 0 : i32
    return %c0_i32, %c0_i32_0 : i32, i32
  }
  func.func @transform_5(%arg0: i32) -> (i32, i32) {
    %c0_i32 = arith.constant 0 : i32
    %c0_i32_0 = arith.constant 0 : i32
    %c0_i32_1 = arith.constant 0 : i32
    return %c0_i32, %c0_i32_0 : i32, i32
  }
  func.func @transform_6(%arg0: i32) -> (i32, i32) {
    %c0_i32 = arith.constant 0 : i32
    %c0_i32_0 = arith.constant 0 : i32
    %c0_i32_1 = arith.constant 0 : i32
    return %c0_i32, %c0_i32_0 : i32, i32
  }
  func.func @transform_7(%arg0: i32) -> (i32, i32) {
    %c0_i32 = arith.constant 0 : i32
    %c0_i32_0 = arith.constant 0 : i32
    %c0_i32_1 = arith.constant 0 : i32
    return %c0_i32, %c0_i32_0 : i32, i32
  }
  func.func @transform_8(%arg0: i32) -> (i32, i32) {
    %c0_i32 = arith.constant 0 : i32
    %c0_i32_0 = arith.constant 0 : i32
    %c0_i32_1 = arith.constant 0 : i32
    return %c0_i32, %c0_i32_0 : i32, i32
  }
  func.func @transform_9(%arg0: i32) -> (i32, i32) {
    %c0_i32 = arith.constant 0 : i32
    %c0_i32_0 = arith.constant 0 : i32
    %c0_i32_1 = arith.constant 0 : i32
    return %c0_i32, %c0_i32_0 : i32, i32
  }
  func.func @transform_10(%arg0: i32) -> (i32, i32) {
    %c0_i32 = arith.constant 0 : i32
    %c0_i32_0 = arith.constant 0 : i32
    %c0_i32_1 = arith.constant 0 : i32
    return %c0_i32, %c0_i32_0 : i32, i32
  }
  func.func @transform_11(%arg0: i32) -> (i32, i32) {
    %c0_i32 = arith.constant 0 : i32
    %c0_i32_0 = arith.constant 0 : i32
    %c0_i32_1 = arith.constant 0 : i32
    return %c0_i32, %c0_i32_0 : i32, i32
  }
  func.func @transform_12(%arg0: i32) -> (i32, i32) {
    %c0_i32 = arith.constant 0 : i32
    %c0_i32_0 = arith.constant 0 : i32
    %c0_i32_1 = arith.constant 0 : i32
    return %c0_i32, %c0_i32_0 : i32, i32
  }
  func.func @transform_13(%arg0: i32) -> (i32, i32) {
    %c0_i32 = arith.constant 0 : i32
    %c0_i32_0 = arith.constant 0 : i32
    return %arg0, %c0_i32 : i32, i32
  }
}

</mosaic_0001>

<llo_original>
// kernel: category_forward.1
$region0: #{category_forward.1}
  #allocation0 [shape = 'u32[]', space=smem, size = 0x4, offset = 0x4, fixed_abs, tag = 'smem constant byte address 0x4 - core index']
  #allocation1 [shape = 'u32[144,128]{1,0:T(1,128)}', space=vmem, size = 0x12000, scoped, tag = 'internal scratch']
  %s0 = inlined_call_operand.vmem [shape: f32[128,256], index: 0, kind: input, shape index: {}]
  %s1 = inlined_call_operand.vmem [shape: bf16[256,96], index: 1, kind: input, shape index: {}]
  %s2 = inlined_call_operand.vmem [shape: bf16[256,96], index: 2, kind: input, shape index: {}]
  %s3 = inlined_call_operand.vmem [shape: f32[1,96], index: 3, kind: input, shape index: {}]
  %s4 = inlined_call_operand.vmem [shape: bf16[192,64], index: 4, kind: input, shape index: {}]
  %s5 = inlined_call_operand.vmem [shape: bf16[192,64], index: 5, kind: input, shape index: {}]
  %s6 = inlined_call_operand.vmem [shape: f32[1,64], index: 6, kind: input, shape index: {}]
  %s7 = inlined_call_operand.vmem [shape: bf16[96,32], index: 7, kind: input, shape index: {}]
  %s8 = inlined_call_operand.vmem [shape: bf16[96,32], index: 8, kind: input, shape index: {}]
  %s9 = inlined_call_operand.vmem [shape: f32[1,32], index: 9, kind: input, shape index: {}]
  %s10 = inlined_call_operand.vmem [shape: bf16[96,256], index: 10, kind: input, shape index: {}]
  %s11 = inlined_call_operand.vmem [shape: bf16[96,256], index: 11, kind: input, shape index: {}]
  %s12 = inlined_call_operand.vmem [shape: f32[1,256], index: 12, kind: input, shape index: {}]
  %s13 = inlined_call_operand.vmem [shape: f32[128,256], index: 13, kind: output, shape index: {}]
  %s14 = sld [smem:[#allocation0]]
  $region85: #{category_forward.1} parent=0
    _
  %s16 = ssub.s32 1, %s14
  %s17 = scalar_select 0, %s16, %s14
  loop: start=0, step=1, limit=6
  $region2: #{category_forward.1} parent=0 // loop_pre_header
    _
  $region3: #{category_forward.1} parent=0 // loop_header
    %s19 = sphi 0, %s23
    %p20 = scmp.ge.s32.totalorder %s19, 6
    %s29 = sphi 0, %s31
    %s32 = sphi 0, %s29
    %s33 = sphi 0, %s32
    %s49 = sphi 0, %s33
    %s53 = sphi 0, %s53
    %s55 = sphi 0, %s53
    %s56 = sphi 0, %s55
    %s70 = sphi 0, %s56
    %s74 = sphi 0, %s74
    %s76 = sphi 0, %s74
    %s77 = sphi 0, %s76
    %s91 = sphi 0, %s77
    %s95 = sphi 0, %s95
    %s97 = sphi 0, %s95
    %s98 = sphi 0, %s97
    %s112 = sphi 0, %s98
    %s116 = sphi 0, %s116
    %s118 = sphi 0, %s116
    %s119 = sphi 0, %s118
    %s133 = sphi 0, %s119
    %s137 = sphi 0, %s137
    %s139 = sphi 0, %s137
    %s140 = sphi 0, %s139
    %s154 = sphi 0, %s140
    %s158 = sphi 0, %s158
    %s160 = sphi 0, %s158
    %s161 = sphi 0, %s160
    %s175 = sphi 0, %s161
    %s179 = sphi 0, %s179
    %s181 = sphi 0, %s179
    %s182 = sphi 0, %s181
    %s196 = sphi 0, %s182
    %s200 = sphi 0, %s200
    %s202 = sphi 0, %s200
    %s203 = sphi 0, %s202
    %s217 = sphi 0, %s203
    %s221 = sphi 0, %s221
    %s223 = sphi 0, %s221
    %s224 = sphi 0, %s223
    %s238 = sphi 0, %s224
    %s242 = sphi 0, %s242
    %s244 = sphi 0, %s242
    %s245 = sphi 0, %s244
    %s259 = sphi 0, %s245
    %s263 = sphi 0, %s263
    %s265 = sphi 0, %s263
    %s266 = sphi 0, %s265
    %s280 = sphi 0, %s266
    %s284 = sphi 0, %s284
    %s286 = sphi 0, %s284
    %s287 = sphi 0, %s286
    %s301 = sphi 0, %s287
    %s307 = sphi 0, %s309
    %s310 = sphi 0, %s307
    %s311 = sphi 0, %s310
    %s327 = sphi 0, %s311
  $region4: #{category_forward.1} parent=0 // loop_header_branch
    %22 = sbr.rel (%p20) target = $region8
  $region5: #{category_forward.1} parent=0 // loop_body
    %s24 = ssub.s32 %s19, 1
    %s25 = ssub.s32 %s19, 2
    %s26 = sadd.s32 %s19, 1
    %s27 = ssub.s32 %s19, %s26
    %p28 = scmp.eq.s32.totalorder %s27, 0
    %s30 = sadd.s32 %s29, 1
    %s31 = scalar_select %p28, %s29, %s30
    %p34 = pneg %p28
    %p35 = scmp.eq.s32.totalorder %s19, 3
    %p36 = por %p34, %p35
    %p37 = scmp.ne.s32.totalorder %s29, %s32
    %p38 = scmp.eq.s32.totalorder %s19, 0
    %p39 = por %p37, %p38
    %p40 = scmp.ne.s32.totalorder %s29, %s32
    %p41 = scmp.eq.s32.totalorder %s24, 3
    %p42 = por %p40, %p41
    %p43 = scmp.ne.s32.totalorder %s32, %s33
    %p44 = scmp.eq.s32.totalorder %s24, 0
    %p45 = por %p43, %p44
    %p46 = scmp.ne.s32.totalorder %s32, %s33
    %p47 = scmp.eq.s32.totalorder %s25, 3
    %p48 = por %p46, %p47
    %p50 = scmp.ne.s32.totalorder %s33, %s49
    %p51 = scmp.eq.s32.totalorder %s25, 0
    %p52 = por %p50, %p51
    %s54 = sadd.s32 %s53, 1
    %p57 = scmp.eq.s32.totalorder %s19, 3
    %p58 = scmp.ne.s32.totalorder %s53, %s55
    %p59 = scmp.eq.s32.totalorder %s19, 0
    %p60 = por %p58, %p59
    %p61 = scmp.ne.s32.totalorder %s53, %s55
    %p62 = scmp.eq.s32.totalorder %s24, 3
    %p63 = por %p61, %p62
    %p64 = scmp.ne.s32.totalorder %s55, %s56
    %p65 = scmp.eq.s32.totalorder %s24, 0
    %p66 = por %p64, %p65
    %p67 = scmp.ne.s32.totalorder %s55, %s56
    %p68 = scmp.eq.s32.totalorder %s25, 3
    %p69 = por %p67, %p68
    %p71 = scmp.ne.s32.totalorder %s56, %s70
    %p72 = scmp.eq.s32.totalorder %s25, 0
    %p73 = por %p71, %p72
    %s75 = sadd.s32 %s74, 1
    %p78 = scmp.eq.s32.totalorder %s19, 3
    %p79 = scmp.ne.s32.totalorder %s74, %s76
    %p80 = scmp.eq.s32.totalorder %s19, 0
    %p81 = por %p79, %p80
    %p82 = scmp.ne.s32.totalorder %s74, %s76
    %p83 = scmp.eq.s32.totalorder %s24, 3
    %p84 = por %p82, %p83
    %p85 = scmp.ne.s32.totalorder %s76, %s77
    %p86 = scmp.eq.s32.totalorder %s24, 0
    %p87 = por %p85, %p86
    %p88 = scmp.ne.s32.totalorder %s76, %s77
    %p89 = scmp.eq.s32.totalorder %s25, 3
    %p90 = por %p88, %p89
    %p92 = scmp.ne.s32.totalorder %s77, %s91
    %p93 = scmp.eq.s32.totalorder %s25, 0
    %p94 = por %p92, %p93
    %s96 = sadd.s32 %s95, 1
    %p99 = scmp.eq.s32.totalorder %s19, 3
    %p100 = scmp.ne.s32.totalorder %s95, %s97
    %p101 = scmp.eq.s32.totalorder %s19, 0
    %p102 = por %p100, %p101
    %p103 = scmp.ne.s32.totalorder %s95, %s97
    %p104 = scmp.eq.s32.totalorder %s24, 3
    %p105 = por %p103, %p104
    %p106 = scmp.ne.s32.totalorder %s97, %s98
    %p107 = scmp.eq.s32.totalorder %s24, 0
    %p108 = por %p106, %p107
    %p109 = scmp.ne.s32.totalorder %s97, %s98
    %p110 = scmp.eq.s32.totalorder %s25, 3
    %p111 = por %p109, %p110
    %p113 = scmp.ne.s32.totalorder %s98, %s112
    %p114 = scmp.eq.s32.totalorder %s25, 0
    %p115 = por %p113, %p114
    %s117 = sadd.s32 %s116, 1
    %p120 = scmp.eq.s32.totalorder %s19, 3
    %p121 = scmp.ne.s32.totalorder %s116, %s118
    %p122 = scmp.eq.s32.totalorder %s19, 0
    %p123 = por %p121, %p122
    %p124 = scmp.ne.s32.totalorder %s116, %s118
    %p125 = scmp.eq.s32.totalorder %s24, 3
    %p126 = por %p124, %p125
    %p127 = scmp.ne.s32.totalorder %s118, %s119
    %p128 = scmp.eq.s32.totalorder %s24, 0
    %p129 = por %p127, %p128
    %p130 = scmp.ne.s32.totalorder %s118, %s119
    %p131 = scmp.eq.s32.totalorder %s25, 3
    %p132 = por %p130, %p131
    %p134 = scmp.ne.s32.totalorder %s119, %s133
    %p135 = scmp.eq.s32.totalorder %s25, 0
    %p136 = por %p134, %p135
    %s138 = sadd.s32 %s137, 1
    %p141 = scmp.eq.s32.totalorder %s19, 3
    %p142 = scmp.ne.s32.totalorder %s137, %s139
    %p143 = scmp.eq.s32.totalorder %s19, 0
    %p144 = por %p142, %p143
    %p145 = scmp.ne.s32.totalorder %s137, %s139
    %p146 = scmp.eq.s32.totalorder %s24, 3
    %p147 = por %p145, %p146
    %p148 = scmp.ne.s32.totalorder %s139, %s140
    %p149 = scmp.eq.s32.totalorder %s24, 0
    %p150 = por %p148, %p149
    %p151 = scmp.ne.s32.totalorder %s139, %s140
    %p152 = scmp.eq.s32.totalorder %s25, 3
    %p153 = por %p151, %p152
    %p155 = scmp.ne.s32.totalorder %s140, %s154
    %p156 = scmp.eq.s32.totalorder %s25, 0
    %p157 = por %p155, %p156
    %s159 = sadd.s32 %s158, 1
    %p162 = scmp.eq.s32.totalorder %s19, 3
    %p163 = scmp.ne.s32.totalorder %s158, %s160
    %p164 = scmp.eq.s32.totalorder %s19, 0
    %p165 = por %p163, %p164
    %p166 = scmp.ne.s32.totalorder %s158, %s160
    %p167 = scmp.eq.s32.totalorder %s24, 3
    %p168 = por %p166, %p167
    %p169 = scmp.ne.s32.totalorder %s160, %s161
    %p170 = scmp.eq.s32.totalorder %s24, 0
    %p171 = por %p169, %p170
    %p172 = scmp.ne.s32.totalorder %s160, %s161
    %p173 = scmp.eq.s32.totalorder %s25, 3
    %p174 = por %p172, %p173
    %p176 = scmp.ne.s32.totalorder %s161, %s175
    %p177 = scmp.eq.s32.totalorder %s25, 0
    %p178 = por %p176, %p177
    %s180 = sadd.s32 %s179, 1
    %p183 = scmp.eq.s32.totalorder %s19, 3
    %p184 = scmp.ne.s32.totalorder %s179, %s181
    %p185 = scmp.eq.s32.totalorder %s19, 0
    %p186 = por %p184, %p185
    %p187 = scmp.ne.s32.totalorder %s179, %s181
    %p188 = scmp.eq.s32.totalorder %s24, 3
    %p189 = por %p187, %p188
    %p190 = scmp.ne.s32.totalorder %s181, %s182
    %p191 = scmp.eq.s32.totalorder %s24, 0
    %p192 = por %p190, %p191
    %p193 = scmp.ne.s32.totalorder %s181, %s182
    %p194 = scmp.eq.s32.totalorder %s25, 3
    %p195 = por %p193, %p194
    %p197 = scmp.ne.s32.totalorder %s182, %s196
    %p198 = scmp.eq.s32.totalorder %s25, 0
    %p199 = por %p197, %p198
    %s201 = sadd.s32 %s200, 1
    %p204 = scmp.eq.s32.totalorder %s19, 3
    %p205 = scmp.ne.s32.totalorder %s200, %s202
    %p206 = scmp.eq.s32.totalorder %s19, 0
    %p207 = por %p205, %p206
    %p208 = scmp.ne.s32.totalorder %s200, %s202
    %p209 = scmp.eq.s32.totalorder %s24, 3
    %p210 = por %p208, %p209
    %p211 = scmp.ne.s32.totalorder %s202, %s203
    %p212 = scmp.eq.s32.totalorder %s24, 0
    %p213 = por %p211, %p212
    %p214 = scmp.ne.s32.totalorder %s202, %s203
    %p215 = scmp.eq.s32.totalorder %s25, 3
    %p216 = por %p214, %p215
    %p218 = scmp.ne.s32.totalorder %s203, %s217
    %p219 = scmp.eq.s32.totalorder %s25, 0
    %p220 = por %p218, %p219
    %s222 = sadd.s32 %s221, 1
    %p225 = scmp.eq.s32.totalorder %s19, 3
    %p226 = scmp.ne.s32.totalorder %s221, %s223
    %p227 = scmp.eq.s32.totalorder %s19, 0
    %p228 = por %p226, %p227
    %p229 = scmp.ne.s32.totalorder %s221, %s223
    %p230 = scmp.eq.s32.totalorder %s24, 3
    %p231 = por %p229, %p230
    %p232 = scmp.ne.s32.totalorder %s223, %s224
    %p233 = scmp.eq.s32.totalorder %s24, 0
    %p234 = por %p232, %p233
    %p235 = scmp.ne.s32.totalorder %s223, %s224
    %p236 = scmp.eq.s32.totalorder %s25, 3
    %p237 = por %p235, %p236
    %p239 = scmp.ne.s32.totalorder %s224, %s238
    %p240 = scmp.eq.s32.totalorder %s25, 0
    %p241 = por %p239, %p240
    %s243 = sadd.s32 %s242, 1
    %p246 = scmp.eq.s32.totalorder %s19, 3
    %p247 = scmp.ne.s32.totalorder %s242, %s244
    %p248 = scmp.eq.s32.totalorder %s19, 0
    %p249 = por %p247, %p248
    %p250 = scmp.ne.s32.totalorder %s242, %s244
    %p251 = scmp.eq.s32.totalorder %s24, 3
    %p252 = por %p250, %p251
    %p253 = scmp.ne.s32.totalorder %s244, %s245
    %p254 = scmp.eq.s32.totalorder %s24, 0
    %p255 = por %p253, %p254
    %p256 = scmp.ne.s32.totalorder %s244, %s245
    %p257 = scmp.eq.s32.totalorder %s25, 3
    %p258 = por %p256, %p257
    %p260 = scmp.ne.s32.totalorder %s245, %s259
    %p261 = scmp.eq.s32.totalorder %s25, 0
    %p262 = por %p260, %p261
    %s264 = sadd.s32 %s263, 1
    %p267 = scmp.eq.s32.totalorder %s19, 3
    %p268 = scmp.ne.s32.totalorder %s263, %s265
    %p269 = scmp.eq.s32.totalorder %s19, 0
    %p270 = por %p268, %p269
    %p271 = scmp.ne.s32.totalorder %s263, %s265
    %p272 = scmp.eq.s32.totalorder %s24, 3
    %p273 = por %p271, %p272
    %p274 = scmp.ne.s32.totalorder %s265, %s266
    %p275 = scmp.eq.s32.totalorder %s24, 0
    %p276 = por %p274, %p275
    %p277 = scmp.ne.s32.totalorder %s265, %s266
    %p278 = scmp.eq.s32.totalorder %s25, 3
    %p279 = por %p277, %p278
    %p281 = scmp.ne.s32.totalorder %s266, %s280
    %p282 = scmp.eq.s32.totalorder %s25, 0
    %p283 = por %p281, %p282
    %s285 = sadd.s32 %s284, 1
    %p288 = scmp.eq.s32.totalorder %s19, 3
    %p289 = scmp.ne.s32.totalorder %s284, %s286
    %p290 = scmp.eq.s32.totalorder %s19, 0
    %p291 = por %p289, %p290
    %p292 = scmp.ne.s32.totalorder %s284, %s286
    %p293 = scmp.eq.s32.totalorder %s24, 3
    %p294 = por %p292, %p293
    %p295 = scmp.ne.s32.totalorder %s286, %s287
    %p296 = scmp.eq.s32.totalorder %s24, 0
    %p297 = por %p295, %p296
    %p298 = scmp.ne.s32.totalorder %s286, %s287
    %p299 = scmp.eq.s32.totalorder %s25, 3
    %p300 = por %p298, %p299
    %p302 = scmp.ne.s32.totalorder %s287, %s301
    %p303 = scmp.eq.s32.totalorder %s25, 0
    %p304 = por %p302, %p303
    %s305 = ssub.s32 %s19, %s26
    %p306 = scmp.eq.s32.totalorder %s305, 0
    %s308 = sadd.s32 %s307, 1
    %s309 = scalar_select %p306, %s307, %s308
    %p312 = pneg %p306
    %p313 = scmp.eq.s32.totalorder %s19, 3
    %p314 = por %p312, %p313
    %p315 = scmp.ne.s32.totalorder %s307, %s310
    %p316 = scmp.eq.s32.totalorder %s19, 0
    %p317 = por %p315, %p316
    %p318 = scmp.ne.s32.totalorder %s307, %s310
    %p319 = scmp.eq.s32.totalorder %s24, 3
    %p320 = por %p318, %p319
    %p321 = scmp.ne.s32.totalorder %s310, %s311
    %p322 = scmp.eq.s32.totalorder %s24, 0
    %p323 = por %p321, %p322
    %p324 = scmp.ne.s32.totalorder %s310, %s311
    %p325 = scmp.eq.s32.totalorder %s25, 3
    %p326 = por %p324, %p325
    %p328 = scmp.ne.s32.totalorder %s311, %s327
    %p329 = scmp.eq.s32.totalorder %s25, 0
    %p330 = por %p328, %p329
    %p331 = scmp.le.s32.totalorder 1, %s19
    %p332 = scmp.lt.s32.totalorder %s19, 5
    %p333 = pnand %p331, %p332
    %p334 = pneg %p333
    // Predicated region
    $region9: #{category_forward.1} parent=5 // pred_check
      _
    $region10: #{category_forward.1} parent=5 // pred_check_branch
      %336 = sbr.rel (%p333) target = $region12
    $region11: #{category_forward.1} parent=5 // pred_region
      %s337 = ssub.s32 %s19, 1
      // Predicated region
      $region13: #{category_forward.1} parent=11 // pred_check
        %p338 = pneg %p66
      $region14: #{category_forward.1} parent=11 // pred_check_branch
        %340 = sbr.rel (%p338) target = $region16
      $region15: #{category_forward.1} parent=11 // pred_region
        _
      $region16: #{category_forward.1} parent=11 // pred_fallthru
        _
      // Predicated region
      $region17: #{category_forward.1} parent=11 // pred_check
        %p341 = pneg %p87
      $region18: #{category_forward.1} parent=11 // pred_check_branch
        %343 = sbr.rel (%p341) target = $region20
      $region19: #{category_forward.1} parent=11 // pred_region
        _
      $region20: #{category_forward.1} parent=11 // pred_fallthru
        _
      // Predicated region
      $region21: #{category_forward.1} parent=11 // pred_check
        %p344 = pneg %p108
      $region22: #{category_forward.1} parent=11 // pred_check_branch
        %346 = sbr.rel (%p344) target = $region24
      $region23: #{category_forward.1} parent=11 // pred_region
        _
      $region24: #{category_forward.1} parent=11 // pred_fallthru
        _
      // Predicated region
      $region25: #{category_forward.1} parent=11 // pred_check
        %p347 = pneg %p129
      $region26: #{category_forward.1} parent=11 // pred_check_branch
        %349 = sbr.rel (%p347) target = $region28
      $region27: #{category_forward.1} parent=11 // pred_region
        _
      $region28: #{category_forward.1} parent=11 // pred_fallthru
        _
      // Predicated region
      $region29: #{category_forward.1} parent=11 // pred_check
        %p350 = pneg %p150
      $region30: #{category_forward.1} parent=11 // pred_check_branch
        %352 = sbr.rel (%p350) target = $region32
      $region31: #{category_forward.1} parent=11 // pred_region
        _
      $region32: #{category_forward.1} parent=11 // pred_fallthru
        _
      // Predicated region
      $region33: #{category_forward.1} parent=11 // pred_check
        %p353 = pneg %p171
      $region34: #{category_forward.1} parent=11 // pred_check_branch
        %355 = sbr.rel (%p353) target = $region36
      $region35: #{category_forward.1} parent=11 // pred_region
        _
      $region36: #{category_forward.1} parent=11 // pred_fallthru
        _
      // Predicated region
      $region37: #{category_forward.1} parent=11 // pred_check
        %p356 = pneg %p192
      $region38: #{category_forward.1} parent=11 // pred_check_branch
        %358 = sbr.rel (%p356) target = $region40
      $region39: #{category_forward.1} parent=11 // pred_region
        _
      $region40: #{category_forward.1} parent=11 // pred_fallthru
        _
      // Predicated region
      $region41: #{category_forward.1} parent=11 // pred_check
        %p359 = pneg %p213
      $region42: #{category_forward.1} parent=11 // pred_check_branch
        %361 = sbr.rel (%p359) target = $region44
      $region43: #{category_forward.1} parent=11 // pred_region
        _
      $region44: #{category_forward.1} parent=11 // pred_fallthru
        _
      // Predicated region
      $region45: #{category_forward.1} parent=11 // pred_check
        %p362 = pneg %p234
      $region46: #{category_forward.1} parent=11 // pred_check_branch
        %364 = sbr.rel (%p362) target = $region48
      $region47: #{category_forward.1} parent=11 // pred_region
        _
      $region48: #{category_forward.1} parent=11 // pred_fallthru
        _
      // Predicated region
      $region49: #{category_forward.1} parent=11 // pred_check
        %p365 = pneg %p255
      $region50: #{category_forward.1} parent=11 // pred_check_branch
        %367 = sbr.rel (%p365) target = $region52
      $region51: #{category_forward.1} parent=11 // pred_region
        _
      $region52: #{category_forward.1} parent=11 // pred_fallthru
        _
      // Predicated region
      $region53: #{category_forward.1} parent=11 // pred_check
        %p368 = pneg %p276
      $region54: #{category_forward.1} parent=11 // pred_check_branch
        %370 = sbr.rel (%p368) target = $region56
      $region55: #{category_forward.1} parent=11 // pred_region
        _
      $region56: #{category_forward.1} parent=11 // pred_fallthru
        _
      // Predicated region
      $region57: #{category_forward.1} parent=11 // pred_check
        %p371 = pneg %p297
      $region58: #{category_forward.1} parent=11 // pred_check_branch
        %373 = sbr.rel (%p371) target = $region60
      $region59: #{category_forward.1} parent=11 // pred_region
        _
      $region60: #{category_forward.1} parent=11 // pred_fallthru
        _
    $region12: #{category_forward.1} parent=5 // pred_fallthru
      _
    %p374 = scmp.lt.s32.totalorder %s19, 4
    // Predicated region
    $region61: #{category_forward.1} parent=5 // pred_check
      %p375 = pneg %p374
    $region62: #{category_forward.1} parent=5 // pred_check_branch
      %377 = sbr.rel (%p375) target = $region64
    $region63: #{category_forward.1} parent=5 // pred_region
      // Predicated region
      $region65: #{category_forward.1} parent=63 // pred_check
        %p378 = pneg %p39
      $region66: #{category_forward.1} parent=63 // pred_check_branch
        %380 = sbr.rel (%p378) target = $region68
      $region67: #{category_forward.1} parent=63 // pred_region
        %s381 = smul.u32 4, %s19
        %p382 = scmp.lt.s32.totalorder %s381, 15
        %s383 = scalar_select %p382, %s381, 15
        %s384 = smul.addr %s383, 2
        %s385 = smul.addr %s384, 8
        %s386 = scalar_lea.vmem %s0, %s385
        %s387 = smul.u32 4, %s19
      $region68: #{category_forward.1} parent=63 // pred_fallthru
        _
    $region64: #{category_forward.1} parent=5 // pred_fallthru
      _
    %p388 = scmp.le.s32.totalorder 1, %s19
    %p389 = scmp.lt.s32.totalorder %s19, 5
    %p390 = pnand %p388, %p389
    %p391 = pneg %p390
    // Predicated region
    $region69: #{category_forward.1} parent=5 // pred_check
      _
    $region70: #{category_forward.1} parent=5 // pred_check_branch
      %393 = sbr.rel (%p390) target = $region72
    $region71: #{category_forward.1} parent=5 // pred_region
      %s394 = ssub.s32 %s19, 1
      %s395 = smul.u32 4, %s24
      %p396 = scmp.lt.s32.totalorder %s395, 15
      %s397 = scalar_select %p396, %s395, 15
      %s398 = smul.addr %s397, 2
      %s399 = smul.addr %s398, 8
      %s400 = scalar_lea.vmem %s0, %s399
      %p401 = pneg %p45
      %p402 = pneg %p42
      %p403 = pneg %p66
      %p404 = pneg %p63
      %p405 = pneg %p87
      %p406 = pneg %p84
      %p407 = pneg %p108
      %p408 = pneg %p105
      %p409 = pneg %p129
      %p410 = pneg %p126
      %p411 = pneg %p150
      %p412 = pneg %p147
      %p413 = pneg %p171
      %p414 = pneg %p168
      %p415 = pneg %p192
      %p416 = pneg %p189
      %p417 = pneg %p213
      %p418 = pneg %p210
      %p419 = pneg %p234
      %p420 = pneg %p231
      %p421 = pneg %p255
      %p422 = pneg %p252
      %p423 = pneg %p276
      %p424 = pneg %p273
      %p425 = pneg %p297
      %p426 = pneg %p294
      %p427 = pneg %p323
      %p428 = pneg %p320
      %s429 = smul.u32 4, %s24
      %p430 = scmp.lt.s32.totalorder %s429, 15
      %s431 = scalar_select %p430, %s429, 15
      %s432 = smul.addr %s431, 2
      %s433 = smul.addr %s432, 8
      %s434 = scalar_lea.vmem %s13, %s433
      %s435 = smul.u32 4, %s24
      %p436 = scmp.lt.s32.totalorder %s435, 15
      %s437 = scalar_select %p436, %s435, 15
      %s438 = smul.addr %s437, 2
      %s439 = smul.addr %s438, 8
      %s440 = scalar_lea.vmem %s0, %s439
      %s441 = smul.u32 4, %s24
      %s442 = smul.u32 4, %s24
      %p443 = scmp.lt.s32.totalorder %s442, 15
      %s444 = scalar_select %p443, %s442, 15
      %s445 = smul.addr %s444, 2
      %s446 = smul.addr %s445, 8
      %s447 = scalar_lea.vmem %s13, %s446
      %s448 = smul.u32 4, %s24
      %v450 = vld [vmem:[%s440] sm:$0xff]
      %v451 = vld [vmem:[%s440 + $0x8] sm:$0xff]
      %v452 = vld [vmem:[%s440 + $0x10] sm:$0xff]
      %v453 = vld [vmem:[%s440 + $0x18] sm:$0xff]
      %v454 = vld [vmem:[%s440 + $0x20] sm:$0xff]
      %v455 = vld [vmem:[%s440 + $0x28] sm:$0xff]
      %v456 = vld [vmem:[%s440 + $0x30] sm:$0xff]
      %v457 = vld [vmem:[%s440 + $0x38] sm:$0xff]
      %v458 = vlaneseq
      %v459 = vshrl.u32 %v458, 7
      %v460 = vadd.s32 %v459, 8
      %v461 = vadd.s32 %v459, 16
      %v462 = vadd.s32 %v459, 24
      %vm463 = vcmp.lt.s32.totalorder %v459, 0
      %v464 = vsub.s32 0, %v459
      %v465 = vsel %vm463, %v464, %v459
      %v466 = vshrl.u32 %v465, 3
      %v467 = vand.u32 %v465, 7
      %v468 = vsub.s32 0, %v467
      %v469 = vsel %vm463, %v468, %v467
      %vm470 = vcmp.lt.s32.totalorder %v460, 0
      %v471 = vsub.s32 0, %v460
      %v472 = vsel %vm470, %v471, %v460
      %v473 = vshrl.u32 %v472, 3
      %v474 = vand.u32 %v472, 7
      %v475 = vsub.s32 0, %v474
      %v476 = vsel %vm470, %v475, %v474
      %vm477 = vcmp.lt.s32.totalorder %v461, 0
      %v478 = vsub.s32 0, %v461
      %v479 = vsel %vm477, %v478, %v461
      %v480 = vshrl.u32 %v479, 3
      %v481 = vand.u32 %v479, 7
      %v482 = vsub.s32 0, %v481
      %v483 = vsel %vm477, %v482, %v481
      %vm484 = vcmp.lt.s32.totalorder %v462, 0
      %v485 = vsub.s32 0, %v462
      %v486 = vsel %vm484, %v485, %v462
      %v487 = vshrl.u32 %v486, 3
      %v488 = vand.u32 %v486, 7
      %v489 = vsub.s32 0, %v488
      %v490 = vsel %vm484, %v489, %v488
      %vm491 = vcmp.ne.s32.totalorder %v469, 0
      %vm492 = vcmp.ne.s32.totalorder %v476, 0
      %vm493 = vcmp.ne.s32.totalorder %v483, 0
      %vm494 = vcmp.ne.s32.totalorder %v490, 0
      %vm495 = vcmp.lt.s32.totalorder %v469, 0
      %vm496 = vcmp.lt.s32.totalorder %v476, 0
      %vm497 = vcmp.lt.s32.totalorder %v483, 0
      %vm498 = vcmp.lt.s32.totalorder %v490, 0
      %vm499 = vmand %vm495, %vm491
      %vm500 = vmand %vm496, %vm492
      %vm501 = vmand %vm497, %vm493
      %vm502 = vmand %vm498, %vm494
      %v503 = vadd.s32 %v469, 8
      %v504 = vadd.s32 %v476, 8
      %v505 = vadd.s32 %v483, 8
      %v506 = vadd.s32 %v490, 8
      %v507 = vsel %vm499, %v503, %v469
      %v508 = vsel %vm500, %v504, %v476
      %v509 = vsel %vm501, %v505, %v483
      %v510 = vsel %vm502, %v506, %v490
      %vm511 = vcmp.ne.s32.totalorder %v507, 0
      %vm512 = vcmp.ne.s32.totalorder %v508, 0
      %vm513 = vcmp.ne.s32.totalorder %v509, 0
      %vm514 = vcmp.ne.s32.totalorder %v510, 0
      %v515 = vsel %vm511, 1, 0
      %v516 = vsel %vm512, 1, 0
      %v517 = vsel %vm513, 1, 0
      %v518 = vsel %vm514, 1, 0
      %v519 = vcvt.s32.f32 %v515
      %v520 = vcvt.s32.f32 %v516
      %v521 = vcvt.s32.f32 %v517
      %v522 = vcvt.s32.f32 %v518
      %vm523 = vcmp.ne.s32.totalorder %v507, 7
      %vm524 = vcmp.ne.s32.totalorder %v508, 7
      %vm525 = vcmp.ne.s32.totalorder %v509, 7
      %vm526 = vcmp.ne.s32.totalorder %v510, 7
      %v527 = vsel %vm523, 1, 0
      %v528 = vsel %vm524, 1, 0
      %v529 = vsel %vm525, 1, 0
      %v530 = vsel %vm526, 1, 0
      %v531 = vcvt.s32.f32 %v527
      %v532 = vcvt.s32.f32 %v528
      %v533 = vcvt.s32.f32 %v529
      %v534 = vcvt.s32.f32 %v530
      %v535 = vpack.c.bf16 %v452, %v450
      %v536 = vpack.c.bf16 %v453, %v451
      %v537 = vpack.c.bf16 %v456, %v454
      %v538 = vpack.c.bf16 %v457, %v455
      %v539 = vunpack.c.l.bf16 %v535
      %v540 = vunpack.c.l.bf16 %v536
      %v541 = vunpack.c.h.bf16 %v535
      %v542 = vunpack.c.h.bf16 %v536
      %v543 = vunpack.c.l.bf16 %v537
      %v544 = vunpack.c.l.bf16 %v538
      %v545 = vunpack.c.h.bf16 %v537
      %v546 = vunpack.c.h.bf16 %v538
      %v547 = vsub.f32 %v450, %v539
      %v548 = vsub.f32 %v451, %v540
      %v549 = vsub.f32 %v452, %v541
      %v550 = vsub.f32 %v453, %v542
      %v551 = vsub.f32 %v454, %v543
      %v552 = vsub.f32 %v455, %v544
      %v553 = vsub.f32 %v456, %v545
      %v554 = vsub.f32 %v457, %v546
      %v555 = vpack.c.bf16 %v549, %v547
      %v556 = vpack.c.bf16 %v550, %v548
      %v557 = vpack.c.bf16 %v553, %v551
      %v558 = vpack.c.bf16 %v554, %v552
      %v559 = vld [vmem:[%s1] sm:$0xf]
      %v560 = vld [vmem:[%s1 + $0x4] sm:$0xf]
      %v561 = vld [vmem:[%s1 + $0x8] sm:$0xf]
      %v562 = vld [vmem:[%s1 + $0xc] sm:$0xf]
      %v563 = vld [vmem:[%s1 + $0x10] sm:$0xf]
      %v564 = vld [vmem:[%s1 + $0x14] sm:$0xf]
      %v565 = vld [vmem:[%s1 + $0x18] sm:$0xf]
      %v566 = vld [vmem:[%s1 + $0x1c] sm:$0xf]
      %v567 = vld [vmem:[%s1 + $0x20] sm:$0xf]
      %v568 = vld [vmem:[%s1 + $0x24] sm:$0xf]
      %v569 = vld [vmem:[%s1 + $0x28] sm:$0xf]
      %v570 = vld [vmem:[%s1 + $0x2c] sm:$0xf]
      %v571 = vld [vmem:[%s1 + $0x30] sm:$0xf]
      %v572 = vld [vmem:[%s1 + $0x34] sm:$0xf]
      %v573 = vld [vmem:[%s1 + $0x38] sm:$0xf]
      %v574 = vld [vmem:[%s1 + $0x3c] sm:$0xf]
      %v575 = vld [vmem:[%s1 + $0x40] sm:$0xf]
      %v576 = vld [vmem:[%s1 + $0x44] sm:$0xf]
      %v577 = vld [vmem:[%s1 + $0x48] sm:$0xf]
      %v578 = vld [vmem:[%s1 + $0x4c] sm:$0xf]
      %v579 = vld [vmem:[%s1 + $0x50] sm:$0xf]
      %v580 = vld [vmem:[%s1 + $0x54] sm:$0xf]
      %v581 = vld [vmem:[%s1 + $0x58] sm:$0xf]
      %v582 = vld [vmem:[%s1 + $0x5c] sm:$0xf]
      %v583 = vld [vmem:[%s1 + $0x60] sm:$0xf]
      %v584 = vld [vmem:[%s1 + $0x64] sm:$0xf]
      %v585 = vld [vmem:[%s1 + $0x68] sm:$0xf]
      %v586 = vld [vmem:[%s1 + $0x6c] sm:$0xf]
      %v587 = vld [vmem:[%s1 + $0x70] sm:$0xf]
      %v588 = vld [vmem:[%s1 + $0x74] sm:$0xf]
      %v589 = vld [vmem:[%s1 + $0x78] sm:$0xf]
      %v590 = vld [vmem:[%s1 + $0x7c] sm:$0xf]
      %v623 = vunpack.c.l.b16 %v559
      %v624 = vunpack.c.l.b16 %v560
      %v625 = vunpack.c.l.b16 %v561
      %v626 = vunpack.c.l.b16 %v562
      %v627 = vunpack.c.l.b16 %v563
      %v628 = vunpack.c.l.b16 %v564
      %v629 = vunpack.c.l.b16 %v565
      %v630 = vunpack.c.l.b16 %v566
      %v631 = vunpack.c.l.b16 %v567
      %v632 = vunpack.c.l.b16 %v568
      %v633 = vunpack.c.l.b16 %v569
      %v634 = vunpack.c.l.b16 %v570
      %v635 = vunpack.c.l.b16 %v571
      %v636 = vunpack.c.l.b16 %v572
      %v637 = vunpack.c.l.b16 %v573
      %v638 = vunpack.c.l.b16 %v574
      %v639 = vunpack.c.l.b16 %v575
      %v640 = vunpack.c.l.b16 %v576
      %v641 = vunpack.c.l.b16 %v577
      %v642 = vunpack.c.l.b16 %v578
      %v643 = vunpack.c.l.b16 %v579
      %v644 = vunpack.c.l.b16 %v580
      %v645 = vunpack.c.l.b16 %v581
      %v646 = vunpack.c.l.b16 %v582
      %v647 = vunpack.c.l.b16 %v583
      %v648 = vunpack.c.l.b16 %v584
      %v649 = vunpack.c.l.b16 %v585
      %v650 = vunpack.c.l.b16 %v586
      %v651 = vunpack.c.l.b16 %v587
      %v652 = vunpack.c.l.b16 %v588
      %v653 = vunpack.c.l.b16 %v589
      %v654 = vunpack.c.l.b16 %v590
      %v655 = vpack.c.b16 %v624, %v623
      %v656 = vpack.c.b16 %v626, %v625
      %v657 = vpack.c.b16 %v628, %v627
      %v658 = vpack.c.b16 %v630, %v629
      %v659 = vpack.c.b16 %v632, %v631
      %v660 = vpack.c.b16 %v634, %v633
      %v661 = vpack.c.b16 %v636, %v635
      %v662 = vpack.c.b16 %v638, %v637
      %v663 = vpack.c.b16 %v640, %v639
      %v664 = vpack.c.b16 %v642, %v641
      %v665 = vpack.c.b16 %v644, %v643
      %v666 = vpack.c.b16 %v646, %v645
      %v667 = vpack.c.b16 %v648, %v647
      %v668 = vpack.c.b16 %v650, %v649
      %v669 = vpack.c.b16 %v652, %v651
      %v670 = vpack.c.b16 %v654, %v653
      %687 = vmatprep.subr.bf16.mxu0 0
      %688 = vmatpush1.bf16.msra.mxu0 %v655
      %689 = vmatprep.subr.bf16.mxu0 0
      %690 = vmatpush1.bf16.msra.mxu0 %v656
      %691 = vmatprep.subr.bf16.mxu0 0
      %692 = vmatpush1.bf16.msra.mxu0 %v657
      %693 = vmatprep.subr.bf16.mxu0 0
      %694 = vmatpush1.bf16.msra.mxu0 %v658
      %695 = vmatprep.subr.bf16.mxu0 0
      %696 = vmatpush1.bf16.msra.mxu0 %v659
      %697 = vmatprep.subr.bf16.mxu0 0
      %698 = vmatpush1.bf16.msra.mxu0 %v660
      %699 = vmatprep.subr.bf16.mxu0 0
      %700 = vmatpush1.bf16.msra.mxu0 %v661
      %701 = vmatprep.subr.bf16.mxu0 0
      %702 = vmatpush1.bf16.msra.mxu0 %v662
      %703 = vmatprep.subr.bf16.mxu0 0
      %704 = vmatpush1.bf16.msra.mxu0 %v663
      %705 = vmatprep.subr.bf16.mxu0 0
      %706 = vmatpush1.bf16.msra.mxu0 %v664
      %707 = vmatprep.subr.bf16.mxu0 0
      %708 = vmatpush1.bf16.msra.mxu0 %v665
      %709 = vmatprep.subr.bf16.mxu0 0
      %710 = vmatpush1.bf16.msra.mxu0 %v666
      %711 = vmatprep.subr.bf16.mxu0 0
      %712 = vmatpush1.bf16.msra.mxu0 %v667
      %713 = vmatprep.subr.bf16.mxu0 0
      %714 = vmatpush1.bf16.msra.mxu0 %v668
      %715 = vmatprep.subr.bf16.mxu0 0
      %716 = vmatpush1.bf16.msra.mxu0 %v669
      %717 = vmatprep.subr.bf16.mxu0 0
      %718 = vmatpush1.bf16.msra.mxu0 %v670
      %719 = vmatprep.mubr.bf16.mxu0 %v556
      %720 = vmatmul.mubr.bf16.gmra.mrb[0].mxu0 %v555
      %v721 = vpop.f32.mrb[0].mxu0
      %v722 = vadd.f32 0.0, %v721
      %v723 = vpop.f32.mrb[0].mxu0
      %v724 = vpop.f32.mrb[0].mxu0
      %v725 = vadd.f32 0.0, %v724
      %v726 = vpop.f32.mrb[0].mxu0
      %727 = vmatprep.mubr.bf16.mxu0 %v558
      %728 = vmatmul.mubr.bf16.gmra.mrb[0].mxu0 %v557
      %v729 = vpop.f32.mrb[0].mxu0
      %v730 = vadd.f32 0.0, %v729
      %v731 = vpop.f32.mrb[0].mxu0
      %v732 = vpop.f32.mrb[0].mxu0
      %v733 = vadd.f32 0.0, %v732
      %v734 = vpop.f32.mrb[0].mxu0
      %735 = vdwg.mxu0
      %736 = vmatprep.subr.bf16.mxu0 0
      %737 = vmatpush1.bf16.msra.mxu0 %v655
      %738 = vmatprep.subr.bf16.mxu0 0
      %739 = vmatpush1.bf16.msra.mxu0 %v656
      %740 = vmatprep.subr.bf16.mxu0 0
      %741 = vmatpush1.bf16.msra.mxu0 %v657
      %742 = vmatprep.subr.bf16.mxu0 0
      %743 = vmatpush1.bf16.msra.mxu0 %v658
      %744 = vmatprep.subr.bf16.mxu0 0
      %745 = vmatpush1.bf16.msra.mxu0 %v659
      %746 = vmatprep.subr.bf16.mxu0 0
      %747 = vmatpush1.bf16.msra.mxu0 %v660
      %748 = vmatprep.subr.bf16.mxu0 0
      %749 = vmatpush1.bf16.msra.mxu0 %v661
      %750 = vmatprep.subr.bf16.mxu0 0
      %751 = vmatpush1.bf16.msra.mxu0 %v662
      %752 = vmatprep.subr.bf16.mxu0 0
      %753 = vmatpush1.bf16.msra.mxu0 %v663
      %754 = vmatprep.subr.bf16.mxu0 0
      %755 = vmatpush1.bf16.msra.mxu0 %v664
      %756 = vmatprep.subr.bf16.mxu0 0
      %757 = vmatpush1.bf16.msra.mxu0 %v665
      %758 = vmatprep.subr.bf16.mxu0 0
      %759 = vmatpush1.bf16.msra.mxu0 %v666
      %760 = vmatprep.subr.bf16.mxu0 0
      %761 = vmatpush1.bf16.msra.mxu0 %v667
      %762 = vmatprep.subr.bf16.mxu0 0
      %763 = vmatpush1.bf16.msra.mxu0 %v668
      %764 = vmatprep.subr.bf16.mxu0 0
      %765 = vmatpush1.bf16.msra.mxu0 %v669
      %766 = vmatprep.subr.bf16.mxu0 0
      %767 = vmatpush1.bf16.msra.mxu0 %v670
      %768 = vmatprep.mubr.bf16.mxu0 %v536
      %769 = vmatmul.mubr.bf16.gmra.mrb[0].mxu0 %v535
      %v770 = vpop.f32.mrb[0].mxu0
      %v771 = vadd.f32 %v722, %v770
      %v772 = vpop.f32.mrb[0].mxu0
      %v773 = vpop.f32.mrb[0].mxu0
      %v774 = vadd.f32 %v725, %v773
      %v775 = vpop.f32.mrb[0].mxu0
      %776 = vmatprep.mubr.bf16.mxu0 %v538
      %777 = vmatmul.mubr.bf16.gmra.mrb[0].mxu0 %v537
      %v778 = vpop.f32.mrb[0].mxu0
      %v779 = vadd.f32 %v730, %v778
      %v780 = vpop.f32.mrb[0].mxu0
      %v781 = vpop.f32.mrb[0].mxu0
      %v782 = vadd.f32 %v733, %v781
      %v783 = vpop.f32.mrb[0].mxu0
      %784 = vdwg.mxu0
      %v785 = vld [vmem:[%s2] sm:$0xf]
      %v786 = vld [vmem:[%s2 + $0x4] sm:$0xf]
      %v787 = vld [vmem:[%s2 + $0x8] sm:$0xf]
      %v788 = vld [vmem:[%s2 + $0xc] sm:$0xf]
      %v789 = vld [vmem:[%s2 + $0x10] sm:$0xf]
      %v790 = vld [vmem:[%s2 + $0x14] sm:$0xf]
      %v791 = vld [vmem:[%s2 + $0x18] sm:$0xf]
      %v792 = vld [vmem:[%s2 + $0x1c] sm:$0xf]
      %v793 = vld [vmem:[%s2 + $0x20] sm:$0xf]
      %v794 = vld [vmem:[%s2 + $0x24] sm:$0xf]
      %v795 = vld [vmem:[%s2 + $0x28] sm:$0xf]
      %v796 = vld [vmem:[%s2 + $0x2c] sm:$0xf]
      %v797 = vld [vmem:[%s2 + $0x30] sm:$0xf]
      %v798 = vld [vmem:[%s2 + $0x34] sm:$0xf]
      %v799 = vld [vmem:[%s2 + $0x38] sm:$0xf]
      %v800 = vld [vmem:[%s2 + $0x3c] sm:$0xf]
      %v801 = vld [vmem:[%s2 + $0x40] sm:$0xf]
      %v802 = vld [vmem:[%s2 + $0x44] sm:$0xf]
      %v803 = vld [vmem:[%s2 + $0x48] sm:$0xf]
      %v804 = vld [vmem:[%s2 + $0x4c] sm:$0xf]
      %v805 = vld [vmem:[%s2 + $0x50] sm:$0xf]
      %v806 = vld [vmem:[%s2 + $0x54] sm:$0xf]
      %v807 = vld [vmem:[%s2 + $0x58] sm:$0xf]
      %v808 = vld [vmem:[%s2 + $0x5c] sm:$0xf]
      %v809 = vld [vmem:[%s2 + $0x60] sm:$0xf]
      %v810 = vld [vmem:[%s2 + $0x64] sm:$0xf]
      %v811 = vld [vmem:[%s2 + $0x68] sm:$0xf]
      %v812 = vld [vmem:[%s2 + $0x6c] sm:$0xf]
      %v813 = vld [vmem:[%s2 + $0x70] sm:$0xf]
      %v814 = vld [vmem:[%s2 + $0x74] sm:$0xf]
      %v815 = vld [vmem:[%s2 + $0x78] sm:$0xf]
      %v816 = vld [vmem:[%s2 + $0x7c] sm:$0xf]
      %v849 = vunpack.c.l.b16 %v785
      %v850 = vunpack.c.l.b16 %v786
      %v851 = vunpack.c.l.b16 %v787
      %v852 = vunpack.c.l.b16 %v788
      %v853 = vunpack.c.l.b16 %v789
      %v854 = vunpack.c.l.b16 %v790
      %v855 = vunpack.c.l.b16 %v791
      %v856 = vunpack.c.l.b16 %v792
      %v857 = vunpack.c.l.b16 %v793
      %v858 = vunpack.c.l.b16 %v794
      %v859 = vunpack.c.l.b16 %v795
      %v860 = vunpack.c.l.b16 %v796
      %v861 = vunpack.c.l.b16 %v797
      %v862 = vunpack.c.l.b16 %v798
      %v863 = vunpack.c.l.b16 %v799
      %v864 = vunpack.c.l.b16 %v800
      %v865 = vunpack.c.l.b16 %v801
      %v866 = vunpack.c.l.b16 %v802
      %v867 = vunpack.c.l.b16 %v803
      %v868 = vunpack.c.l.b16 %v804
      %v869 = vunpack.c.l.b16 %v805
      %v870 = vunpack.c.l.b16 %v806
      %v871 = vunpack.c.l.b16 %v807
      %v872 = vunpack.c.l.b16 %v808
      %v873 = vunpack.c.l.b16 %v809
      %v874 = vunpack.c.l.b16 %v810
      %v875 = vunpack.c.l.b16 %v811
      %v876 = vunpack.c.l.b16 %v812
      %v877 = vunpack.c.l.b16 %v813
      %v878 = vunpack.c.l.b16 %v814
      %v879 = vunpack.c.l.b16 %v815
      %v880 = vunpack.c.l.b16 %v816
      %v881 = vpack.c.b16 %v850, %v849
      %v882 = vpack.c.b16 %v852, %v851
      %v883 = vpack.c.b16 %v854, %v853
      %v884 = vpack.c.b16 %v856, %v855
      %v885 = vpack.c.b16 %v858, %v857
      %v886 = vpack.c.b16 %v860, %v859
      %v887 = vpack.c.b16 %v862, %v861
      %v888 = vpack.c.b16 %v864, %v863
      %v889 = vpack.c.b16 %v866, %v865
      %v890 = vpack.c.b16 %v868, %v867
      %v891 = vpack.c.b16 %v870, %v869
      %v892 = vpack.c.b16 %v872, %v871
      %v893 = vpack.c.b16 %v874, %v873
      %v894 = vpack.c.b16 %v876, %v875
      %v895 = vpack.c.b16 %v878, %v877
      %v896 = vpack.c.b16 %v880, %v879
      %913 = vmatprep.subr.bf16.mxu0 0
      %914 = vmatpush1.bf16.msra.mxu0 %v881
      %915 = vmatprep.subr.bf16.mxu0 0
      %916 = vmatpush1.bf16.msra.mxu0 %v882
      %917 = vmatprep.subr.bf16.mxu0 0
      %918 = vmatpush1.bf16.msra.mxu0 %v883
      %919 = vmatprep.subr.bf16.mxu0 0
      %920 = vmatpush1.bf16.msra.mxu0 %v884
      %921 = vmatprep.subr.bf16.mxu0 0
      %922 = vmatpush1.bf16.msra.mxu0 %v885
      %923 = vmatprep.subr.bf16.mxu0 0
      %924 = vmatpush1.bf16.msra.mxu0 %v886
      %925 = vmatprep.subr.bf16.mxu0 0
      %926 = vmatpush1.bf16.msra.mxu0 %v887
      %927 = vmatprep.subr.bf16.mxu0 0
      %928 = vmatpush1.bf16.msra.mxu0 %v888
      %929 = vmatprep.subr.bf16.mxu0 0
      %930 = vmatpush1.bf16.msra.mxu0 %v889
      %931 = vmatprep.subr.bf16.mxu0 0
      %932 = vmatpush1.bf16.msra.mxu0 %v890
      %933 = vmatprep.subr.bf16.mxu0 0
      %934 = vmatpush1.bf16.msra.mxu0 %v891
      %935 = vmatprep.subr.bf16.mxu0 0
      %936 = vmatpush1.bf16.msra.mxu0 %v892
      %937 = vmatprep.subr.bf16.mxu0 0
      %938 = vmatpush1.bf16.msra.mxu0 %v893
      %939 = vmatprep.subr.bf16.mxu0 0
      %940 = vmatpush1.bf16.msra.mxu0 %v894
      %941 = vmatprep.subr.bf16.mxu0 0
      %942 = vmatpush1.bf16.msra.mxu0 %v895
      %943 = vmatprep.subr.bf16.mxu0 0
      %944 = vmatpush1.bf16.msra.mxu0 %v896
      %945 = vmatprep.mubr.bf16.mxu0 %v536
      %946 = vmatmul.mubr.bf16.gmra.mrb[0].mxu0 %v535
      %v947 = vpop.f32.mrb[0].mxu0
      %v948 = vadd.f32 0.0, %v947
      %v949 = vpop.f32.mrb[0].mxu0
      %v950 = vpop.f32.mrb[0].mxu0
      %v951 = vadd.f32 0.0, %v950
      %v952 = vpop.f32.mrb[0].mxu0
      %953 = vmatprep.mubr.bf16.mxu0 %v538
      %954 = vmatmul.mubr.bf16.gmra.mrb[0].mxu0 %v537
      %v955 = vpop.f32.mrb[0].mxu0
      %v956 = vadd.f32 0.0, %v955
      %v957 = vpop.f32.mrb[0].mxu0
      %v958 = vpop.f32.mrb[0].mxu0
      %v959 = vadd.f32 0.0, %v958
      %v960 = vpop.f32.mrb[0].mxu0
      %961 = vdwg.mxu0
      %v962 = vadd.f32 %v771, %v948
      %v963 = vadd.f32 %v774, %v951
      %v964 = vadd.f32 %v779, %v956
      %v965 = vadd.f32 %v782, %v959
      %v966 = vld [vmem:[%s3] sm:$0x1]
      %v968 = vlaneseq
      %v969 = vshrl.u32 %v968, 7
      %v970 = vsub.s32 0, %v969
      %v971 = vrot.slane %v966, %v970
      %v973 = vadd.f32 %v962, %v971
      %v974 = vadd.f32 %v963, %v971
      %v975 = vadd.f32 %v964, %v971
      %v976 = vadd.f32 %v965, %v971
      %v977 = vmax.f32 %v973, 0.0
      %v978 = vmax.f32 %v974, 0.0
      %v979 = vmax.f32 %v975, 0.0
      %v980 = vmax.f32 %v976, 0.0
      %v981 = vrot.slane %v977, 7
      %v982 = vrot.slane %v978, 7
      %v983 = vrot.slane %v979, 7
      %v984 = vrot.slane %v980, 7
      %vm985 = vcmp.lt.s32.totalorder %v459, 1
      %v986 = vsel %vm985, %v983, %v984
      %v987 = vsel %vm985, %v982, %v983
      %v988 = vsel %vm985, %v981, %v982
      %v989 = vsel %vm985, %v984, %v981
      %v990 = vmul.f32 %v989, %v519
      %v991 = vmul.f32 %v988, %v520
      %v992 = vmul.f32 %v987, %v521
      %v993 = vmul.f32 %v986, %v522
      %v994 = vrot.slane %v977, 1
      %v995 = vrot.slane %v978, 1
      %v996 = vrot.slane %v979, 1
      %v997 = vrot.slane %v980, 1
      %vm998 = vcmp.lt.s32.totalorder %v459, 7
      %v999 = vsel %vm998, %v996, %v997
      %v1000 = vsel %vm998, %v995, %v996
      %v1001 = vsel %vm998, %v994, %v995
      %v1002 = vsel %vm998, %v997, %v994
      %v1003 = vmul.f32 %v1001, %v531
      %v1004 = vmul.f32 %v1000, %v532
      %v1005 = vmul.f32 %v999, %v533
      %v1006 = vmul.f32 %v1002, %v534
      %1011 = vrot.lane.b32.xlu0 %v977, 64
      %v1012 = vpop.permute.xlu0 %1011
      %1013 = vrot.lane.b32.xlu0 %v978, 64
      %v1014 = vpop.permute.xlu0 %1013
      %1015 = vrot.lane.b32.xlu0 %v979, 64
      %v1016 = vpop.permute.xlu0 %1015
      %1017 = vrot.lane.b32.xlu0 %v980, 64
      %v1018 = vpop.permute.xlu0 %1017
      %vm1023 = vcmask 523264
      %v1024 = vsel %vm1023, %v990, %v1012
      %v1025 = vsel %vm1023, %v991, %v1014
      %v1026 = vsel %vm1023, %v992, %v1016
      %v1027 = vsel %vm1023, %v993, %v1018
      %v1028 = vpack.c.bf16 %v1025, %v1024
      %v1029 = vpack.c.bf16 %v1004, %v1003
      %v1030 = vpack.c.bf16 %v1027, %v1026
      %v1031 = vpack.c.bf16 %v1006, %v1005
      %v1032 = vld [vmem:[%s4] sm:$0xf]
      %v1033 = vld [vmem:[%s4 + $0x4] sm:$0xf]
      %v1034 = vld [vmem:[%s4 + $0x8] sm:$0xf]
      %v1035 = vld [vmem:[%s4 + $0xc] sm:$0xf]
      %v1036 = vld [vmem:[%s4 + $0x10] sm:$0xf]
      %v1037 = vld [vmem:[%s4 + $0x14] sm:$0xf]
      %v1038 = vld [vmem:[%s4 + $0x18] sm:$0xf]
      %v1039 = vld [vmem:[%s4 + $0x1c] sm:$0xf]
      %v1040 = vld [vmem:[%s4 + $0x20] sm:$0xf]
      %v1041 = vld [vmem:[%s4 + $0x24] sm:$0xf]
      %v1042 = vld [vmem:[%s4 + $0x28] sm:$0xf]
      %v1043 = vld [vmem:[%s4 + $0x2c] sm:$0xf]
      %v1044 = vld [vmem:[%s4 + $0x30] sm:$0xf]
      %v1045 = vld [vmem:[%s4 + $0x34] sm:$0xf]
      %v1046 = vld [vmem:[%s4 + $0x38] sm:$0xf]
      %v1047 = vld [vmem:[%s4 + $0x3c] sm:$0xf]
      %v1048 = vld [vmem:[%s4 + $0x40] sm:$0xf]
      %v1049 = vld [vmem:[%s4 + $0x44] sm:$0xf]
      %v1050 = vld [vmem:[%s4 + $0x48] sm:$0xf]
      %v1051 = vld [vmem:[%s4 + $0x4c] sm:$0xf]
      %v1052 = vld [vmem:[%s4 + $0x50] sm:$0xf]
      %v1053 = vld [vmem:[%s4 + $0x54] sm:$0xf]
      %v1054 = vld [vmem:[%s4 + $0x58] sm:$0xf]
      %v1055 = vld [vmem:[%s4 + $0x5c] sm:$0xf]
      %v1056 = vld [vmem:[%s5] sm:$0xf]
      %v1057 = vld [vmem:[%s5 + $0x4] sm:$0xf]
      %v1058 = vld [vmem:[%s5 + $0x8] sm:$0xf]
      %v1059 = vld [vmem:[%s5 + $0xc] sm:$0xf]
      %v1060 = vld [vmem:[%s5 + $0x10] sm:$0xf]
      %v1061 = vld [vmem:[%s5 + $0x14] sm:$0xf]
      %v1062 = vld [vmem:[%s5 + $0x18] sm:$0xf]
      %v1063 = vld [vmem:[%s5 + $0x1c] sm:$0xf]
      %v1064 = vld [vmem:[%s5 + $0x20] sm:$0xf]
      %v1065 = vld [vmem:[%s5 + $0x24] sm:$0xf]
      %v1066 = vld [vmem:[%s5 + $0x28] sm:$0xf]
      %v1067 = vld [vmem:[%s5 + $0x2c] sm:$0xf]
      %v1068 = vld [vmem:[%s5 + $0x30] sm:$0xf]
      %v1069 = vld [vmem:[%s5 + $0x34] sm:$0xf]
      %v1070 = vld [vmem:[%s5 + $0x38] sm:$0xf]
      %v1071 = vld [vmem:[%s5 + $0x3c] sm:$0xf]
      %v1072 = vld [vmem:[%s5 + $0x40] sm:$0xf]
      %v1073 = vld [vmem:[%s5 + $0x44] sm:$0xf]
      %v1074 = vld [vmem:[%s5 + $0x48] sm:$0xf]
      %v1075 = vld [vmem:[%s5 + $0x4c] sm:$0xf]
      %v1076 = vld [vmem:[%s5 + $0x50] sm:$0xf]
      %v1077 = vld [vmem:[%s5 + $0x54] sm:$0xf]
      %v1078 = vld [vmem:[%s5 + $0x58] sm:$0xf]
      %v1079 = vld [vmem:[%s5 + $0x5c] sm:$0xf]
      %v1104 = vunpack.c.l.b16 %v1056
      %v1105 = vunpack.c.l.b16 %v1057
      %v1106 = vunpack.c.l.b16 %v1058
      %v1107 = vunpack.c.l.b16 %v1059
      %v1108 = vunpack.c.l.b16 %v1060
      %v1109 = vunpack.c.l.b16 %v1061
      %v1110 = vunpack.c.l.b16 %v1062
      %v1111 = vunpack.c.l.b16 %v1063
      %v1112 = vunpack.c.l.b16 %v1064
      %v1113 = vunpack.c.l.b16 %v1065
      %v1114 = vunpack.c.l.b16 %v1066
      %v1115 = vunpack.c.l.b16 %v1067
      %v1116 = vunpack.c.l.b16 %v1068
      %v1117 = vunpack.c.l.b16 %v1069
      %v1118 = vunpack.c.l.b16 %v1070
      %v1119 = vunpack.c.l.b16 %v1071
      %v1120 = vunpack.c.l.b16 %v1072
      %v1121 = vunpack.c.l.b16 %v1073
      %v1122 = vunpack.c.l.b16 %v1074
      %v1123 = vunpack.c.l.b16 %v1075
      %v1124 = vunpack.c.l.b16 %v1076
      %v1125 = vunpack.c.l.b16 %v1077
      %v1126 = vunpack.c.l.b16 %v1078
      %v1127 = vunpack.c.l.b16 %v1079
      %v1128 = vpack.c.b16 %v1105, %v1104
      %v1129 = vpack.c.b16 %v1107, %v1106
      %v1130 = vpack.c.b16 %v1109, %v1108
      %v1131 = vpack.c.b16 %v1111, %v1110
      %v1132 = vpack.c.b16 %v1113, %v1112
      %v1133 = vpack.c.b16 %v1115, %v1114
      %v1134 = vpack.c.b16 %v1117, %v1116
      %v1135 = vpack.c.b16 %v1119, %v1118
      %v1136 = vpack.c.b16 %v1121, %v1120
      %v1137 = vpack.c.b16 %v1123, %v1122
      %v1138 = vpack.c.b16 %v1125, %v1124
      %v1139 = vpack.c.b16 %v1127, %v1126
      %v1153 = vsel %vm1023, %v1029, 0
      %v1156 = vsel %vm1023, %v1031, 0
      %1158 = vmatprep.subr.bf16.mxu0 0
      %1159 = vmatpush1.bf16.msra.mxu0 %v1128
      %1160 = vmatprep.subr.bf16.mxu0 0
      %1161 = vmatpush1.bf16.msra.mxu0 %v1129
      %1162 = vmatprep.subr.bf16.mxu0 0
      %1163 = vmatpush1.bf16.msra.mxu0 %v1130
      %1164 = vmatprep.subr.bf16.mxu0 0
      %1165 = vmatpush1.bf16.msra.mxu0 %v1131
      %1166 = vmatprep.subr.bf16.mxu0 0
      %1167 = vmatpush1.bf16.msra.mxu0 %v1132
      %1168 = vmatprep.subr.bf16.mxu0 0
      %1169 = vmatpush1.bf16.msra.mxu0 %v1133
      %1170 = vmatprep.subr.bf16.mxu0 0
      %1171 = vmatpush1.bf16.msra.mxu0 %v1134
      %1172 = vmatprep.subr.bf16.mxu0 0
      %1173 = vmatpush1.bf16.msra.mxu0 %v1135
      %1174 = vmatprep.subr.bf16.mxu0 0
      %1175 = vmatpush1.bf16.msra.mxu0 %v1136
      %1176 = vmatprep.subr.bf16.mxu0 0
      %1177 = vmatpush1.bf16.msra.mxu0 %v1137
      %1178 = vmatprep.subr.bf16.mxu0 0
      %1179 = vmatpush1.bf16.msra.mxu0 %v1138
      %1180 = vmatprep.subr.bf16.mxu0 0
      %1181 = vmatpush1.bf16.msra.mxu0 %v1139
      %1182 = vmatprep.subr.bf16.mxu0 0
      %1183 = vmatpush1.bf16.msra.mxu0 0
      %1184 = vmatprep.subr.bf16.mxu0 0
      %1185 = vmatpush1.bf16.msra.mxu0 0
      %1186 = vmatprep.subr.bf16.mxu0 0
      %1187 = vmatpush1.bf16.msra.mxu0 0
      %1188 = vmatprep.subr.bf16.mxu0 0
      %1189 = vmatpush1.bf16.msra.mxu0 0
      %1190 = vmatprep.mubr.bf16.mxu0 %v1153
      %1191 = vmatmul.mubr.bf16.gmra.mrb[0].mxu0 %v1028
      %v1192 = vpop.f32.mrb[0].mxu0
      %v1193 = vadd.f32 0.0, %v1192
      %v1194 = vpop.f32.mrb[0].mxu0
      %v1195 = vpop.f32.mrb[0].mxu0
      %v1196 = vadd.f32 0.0, %v1195
      %v1197 = vpop.f32.mrb[0].mxu0
      %1198 = vmatprep.mubr.bf16.mxu0 %v1156
      %1199 = vmatmul.mubr.bf16.gmra.mrb[0].mxu0 %v1030
      %v1200 = vpop.f32.mrb[0].mxu0
      %v1201 = vadd.f32 0.0, %v1200
      %v1202 = vpop.f32.mrb[0].mxu0
      %v1203 = vpop.f32.mrb[0].mxu0
      %v1204 = vadd.f32 0.0, %v1203
      %v1205 = vpop.f32.mrb[0].mxu0
      %1206 = vdwg.mxu0
      %v1231 = vunpack.c.l.b16 %v1032
      %v1232 = vunpack.c.l.b16 %v1033
      %v1233 = vunpack.c.l.b16 %v1034
      %v1234 = vunpack.c.l.b16 %v1035
      %v1235 = vunpack.c.l.b16 %v1036
      %v1236 = vunpack.c.l.b16 %v1037
      %v1237 = vunpack.c.l.b16 %v1038
      %v1238 = vunpack.c.l.b16 %v1039
      %v1239 = vunpack.c.l.b16 %v1040
      %v1240 = vunpack.c.l.b16 %v1041
      %v1241 = vunpack.c.l.b16 %v1042
      %v1242 = vunpack.c.l.b16 %v1043
      %v1243 = vunpack.c.l.b16 %v1044
      %v1244 = vunpack.c.l.b16 %v1045
      %v1245 = vunpack.c.l.b16 %v1046
      %v1246 = vunpack.c.l.b16 %v1047
      %v1247 = vunpack.c.l.b16 %v1048
      %v1248 = vunpack.c.l.b16 %v1049
      %v1249 = vunpack.c.l.b16 %v1050
      %v1250 = vunpack.c.l.b16 %v1051
      %v1251 = vunpack.c.l.b16 %v1052
      %v1252 = vunpack.c.l.b16 %v1053
      %v1253 = vunpack.c.l.b16 %v1054
      %v1254 = vunpack.c.l.b16 %v1055
      %v1255 = vpack.c.b16 %v1232, %v1231
      %v1256 = vpack.c.b16 %v1234, %v1233
      %v1257 = vpack.c.b16 %v1236, %v1235
      %v1258 = vpack.c.b16 %v1238, %v1237
      %v1259 = vpack.c.b16 %v1240, %v1239
      %v1260 = vpack.c.b16 %v1242, %v1241
      %v1261 = vpack.c.b16 %v1244, %v1243
      %v1262 = vpack.c.b16 %v1246, %v1245
      %v1263 = vpack.c.b16 %v1248, %v1247
      %v1264 = vpack.c.b16 %v1250, %v1249
      %v1265 = vpack.c.b16 %v1252, %v1251
      %v1266 = vpack.c.b16 %v1254, %v1253
      %1279 = vmatprep.subr.bf16.mxu0 0
      %1280 = vmatpush1.bf16.msra.mxu0 %v1255
      %1281 = vmatprep.subr.bf16.mxu0 0
      %1282 = vmatpush1.bf16.msra.mxu0 %v1256
      %1283 = vmatprep.subr.bf16.mxu0 0
      %1284 = vmatpush1.bf16.msra.mxu0 %v1257
      %1285 = vmatprep.subr.bf16.mxu0 0
      %1286 = vmatpush1.bf16.msra.mxu0 %v1258
      %1287 = vmatprep.subr.bf16.mxu0 0
      %1288 = vmatpush1.bf16.msra.mxu0 %v1259
      %1289 = vmatprep.subr.bf16.mxu0 0
      %1290 = vmatpush1.bf16.msra.mxu0 %v1260
      %1291 = vmatprep.subr.bf16.mxu0 0
      %1292 = vmatpush1.bf16.msra.mxu0 %v1261
      %1293 = vmatprep.subr.bf16.mxu0 0
      %1294 = vmatpush1.bf16.msra.mxu0 %v1262
      %1295 = vmatprep.subr.bf16.mxu0 0
      %1296 = vmatpush1.bf16.msra.mxu0 %v1263
      %1297 = vmatprep.subr.bf16.mxu0 0
      %1298 = vmatpush1.bf16.msra.mxu0 %v1264
      %1299 = vmatprep.subr.bf16.mxu0 0
      %1300 = vmatpush1.bf16.msra.mxu0 %v1265
      %1301 = vmatprep.subr.bf16.mxu0 0
      %1302 = vmatpush1.bf16.msra.mxu0 %v1266
      %1303 = vmatprep.subr.bf16.mxu0 0
      %1304 = vmatpush1.bf16.msra.mxu0 0
      %1305 = vmatprep.subr.bf16.mxu0 0
      %1306 = vmatpush1.bf16.msra.mxu0 0
      %1307 = vmatprep.subr.bf16.mxu0 0
      %1308 = vmatpush1.bf16.msra.mxu0 0
      %1309 = vmatprep.subr.bf16.mxu0 0
      %1310 = vmatpush1.bf16.msra.mxu0 0
      %1311 = vmatprep.mubr.bf16.mxu0 %v1153
      %1312 = vmatmul.mubr.bf16.gmra.mrb[0].mxu0 %v1028
      %v1313 = vpop.f32.mrb[0].mxu0
      %v1314 = vadd.f32 %v1193, %v1313
      %v1315 = vpop.f32.mrb[0].mxu0
      %v1316 = vpop.f32.mrb[0].mxu0
      %v1317 = vadd.f32 %v1196, %v1316
      %v1318 = vpop.f32.mrb[0].mxu0
      %1319 = vmatprep.mubr.bf16.mxu0 %v1156
      %1320 = vmatmul.mubr.bf16.gmra.mrb[0].mxu0 %v1030
      %v1321 = vpop.f32.mrb[0].mxu0
      %v1322 = vadd.f32 %v1201, %v1321
      %v1323 = vpop.f32.mrb[0].mxu0
      %v1324 = vpop.f32.mrb[0].mxu0
      %v1325 = vadd.f32 %v1204, %v1324
      %v1326 = vpop.f32.mrb[0].mxu0
      %1327 = vdwg.mxu0
      %v1328 = vld [vmem:[%s6] sm:$0x1]
      %v1330 = vlaneseq
      %v1331 = vshrl.u32 %v1330, 7
      %v1332 = vsub.s32 0, %v1331
      %v1333 = vrot.slane %v1328, %v1332
      %v1335 = vadd.f32 %v1314, %v1333
      %v1336 = vadd.f32 %v1317, %v1333
      %v1337 = vadd.f32 %v1322, %v1333
      %v1338 = vadd.f32 %v1325, %v1333
      %v1339 = vmax.f32 %v1335, 0.0
      %v1340 = vmax.f32 %v1336, 0.0
      %v1341 = vmax.f32 %v1337, 0.0
      %v1342 = vmax.f32 %v1338, 0.0
      %1347 = vrot.lane.b32.xlu0 %v1339, 96
      %v1348 = vpop.permute.xlu0 %1347
      %1349 = vrot.lane.b32.xlu0 %v1340, 96
      %v1350 = vpop.permute.xlu0 %1349
      %1351 = vrot.lane.b32.xlu0 %v1341, 96
      %v1352 = vpop.permute.xlu0 %1351
      %1353 = vrot.lane.b32.xlu0 %v1342, 96
      %v1354 = vpop.permute.xlu0 %1353
      %v1359 = vrot.slane %v1348, 7
      %v1360 = vrot.slane %v1350, 7
      %v1361 = vrot.slane %v1352, 7
      %v1362 = vrot.slane %v1354, 7
      %v1363 = vsel %vm985, %v1361, %v1362
      %v1364 = vsel %vm985, %v1360, %v1361
      %v1365 = vsel %vm985, %v1359, %v1360
      %v1366 = vsel %vm985, %v1362, %v1359
      %v1367 = vmul.f32 %v1366, %v519
      %v1368 = vmul.f32 %v1365, %v520
      %v1369 = vmul.f32 %v1364, %v521
      %v1370 = vmul.f32 %v1363, %v522
      %v1371 = vrot.slane %v1348, 1
      %v1372 = vrot.slane %v1350, 1
      %v1373 = vrot.slane %v1352, 1
      %v1374 = vrot.slane %v1354, 1
      %v1375 = vsel %vm998, %v1373, %v1374
      %v1376 = vsel %vm998, %v1372, %v1373
      %v1377 = vsel %vm998, %v1371, %v1372
      %v1378 = vsel %vm998, %v1374, %v1371
      %v1379 = vmul.f32 %v1377, %v531
      %v1380 = vmul.f32 %v1376, %v532
      %v1381 = vmul.f32 %v1375, %v533
      %v1382 = vmul.f32 %v1378, %v534
      %1387 = vrot.lane.b32.xlu0 %v1379, 64
      %v1388 = vpop.permute.xlu0 %1387
      %1389 = vrot.lane.b32.xlu0 %v1380, 64
      %v1390 = vpop.permute.xlu0 %1389
      %1391 = vrot.lane.b32.xlu0 %v1381, 64
      %v1392 = vpop.permute.xlu0 %1391
      %1393 = vrot.lane.b32.xlu0 %v1382, 64
      %v1394 = vpop.permute.xlu0 %1393
      %vm1399 = vcmask 261120
      %v1400 = vsel %vm1399, %v1367, %v1339
      %v1401 = vsel %vm1399, %v1368, %v1340
      %v1402 = vsel %vm1399, %v1369, %v1341
      %v1403 = vsel %vm1399, %v1370, %v1342
      %v1404 = vsel %vm1023, %v1400, %v1388
      %v1405 = vsel %vm1023, %v1401, %v1390
      %v1406 = vsel %vm1023, %v1402, %v1392
      %v1407 = vsel %vm1023, %v1403, %v1394
      %v1408 = vpack.c.bf16 %v1405, %v1404
      %v1409 = vpack.c.bf16 %v1407, %v1406
      %v1410 = vld [vmem:[%s7] sm:$0xf]
      %v1411 = vld [vmem:[%s7 + $0x4] sm:$0xf]
      %v1412 = vld [vmem:[%s7 + $0x8] sm:$0xf]
      %v1413 = vld [vmem:[%s7 + $0xc] sm:$0xf]
      %v1414 = vld [vmem:[%s7 + $0x10] sm:$0xf]
      %v1415 = vld [vmem:[%s7 + $0x14] sm:$0xf]
      %v1416 = vld [vmem:[%s7 + $0x18] sm:$0xf]
      %v1417 = vld [vmem:[%s7 + $0x1c] sm:$0xf]
      %v1418 = vld [vmem:[%s7 + $0x20] sm:$0xf]
      %v1419 = vld [vmem:[%s7 + $0x24] sm:$0xf]
      %v1420 = vld [vmem:[%s7 + $0x28] sm:$0xf]
      %v1421 = vld [vmem:[%s7 + $0x2c] sm:$0xf]
      %v1422 = vld [vmem:[%s8] sm:$0xf]
      %v1423 = vld [vmem:[%s8 + $0x4] sm:$0xf]
      %v1424 = vld [vmem:[%s8 + $0x8] sm:$0xf]
      %v1425 = vld [vmem:[%s8 + $0xc] sm:$0xf]
      %v1426 = vld [vmem:[%s8 + $0x10] sm:$0xf]
      %v1427 = vld [vmem:[%s8 + $0x14] sm:$0xf]
      %v1428 = vld [vmem:[%s8 + $0x18] sm:$0xf]
      %v1429 = vld [vmem:[%s8 + $0x1c] sm:$0xf]
      %v1430 = vld [vmem:[%s8 + $0x20] sm:$0xf]
      %v1431 = vld [vmem:[%s8 + $0x24] sm:$0xf]
      %v1432 = vld [vmem:[%s8 + $0x28] sm:$0xf]
      %v1433 = vld [vmem:[%s8 + $0x2c] sm:$0xf]
      %v1446 = vunpack.c.l.b16 %v1422
      %v1447 = vunpack.c.l.b16 %v1423
      %v1448 = vunpack.c.l.b16 %v1424
      %v1449 = vunpack.c.l.b16 %v1425
      %v1450 = vunpack.c.l.b16 %v1426
      %v1451 = vunpack.c.l.b16 %v1427
      %v1452 = vunpack.c.l.b16 %v1428
      %v1453 = vunpack.c.l.b16 %v1429
      %v1454 = vunpack.c.l.b16 %v1430
      %v1455 = vunpack.c.l.b16 %v1431
      %v1456 = vunpack.c.l.b16 %v1432
      %v1457 = vunpack.c.l.b16 %v1433
      %v1458 = vpack.c.b16 %v1447, %v1446
      %v1459 = vpack.c.b16 %v1449, %v1448
      %v1460 = vpack.c.b16 %v1451, %v1450
      %v1461 = vpack.c.b16 %v1453, %v1452
      %v1462 = vpack.c.b16 %v1455, %v1454
      %v1463 = vpack.c.b16 %v1457, %v1456
      %vm1470 = vcmask 785408
      %v1472 = vsel %vm1470, %v1408, 0
      %v1475 = vsel %vm1470, %v1409, 0
      %1477 = vmatprep.subr.bf16.mxu0 0
      %1478 = vmatpush1.bf16.msra.mxu0 %v1458
      %1479 = vmatprep.subr.bf16.mxu0 0
      %1480 = vmatpush1.bf16.msra.mxu0 %v1459
      %1481 = vmatprep.subr.bf16.mxu0 0
      %1482 = vmatpush1.bf16.msra.mxu0 %v1460
      %1483 = vmatprep.subr.bf16.mxu0 0
      %1484 = vmatpush1.bf16.msra.mxu0 %v1461
      %1485 = vmatprep.subr.bf16.mxu0 0
      %1486 = vmatpush1.bf16.msra.mxu0 %v1462
      %1487 = vmatprep.subr.bf16.mxu0 0
      %1488 = vmatpush1.bf16.msra.mxu0 %v1463
      %1489 = vmatprep.subr.bf16.mxu0 0
      %1490 = vmatpush1.bf16.msra.mxu0 0
      %1491 = vmatprep.subr.bf16.mxu0 0
      %1492 = vmatpush1.bf16.msra.mxu0 0
      %1493 = vmatprep.subr.bf16.mxu0 0
      %1494 = vmatpush1.bf16.msra.mxu0 0
      %1495 = vmatprep.subr.bf16.mxu0 0
      %1496 = vmatpush1.bf16.msra.mxu0 0
      %1497 = vmatprep.subr.bf16.mxu0 0
      %1498 = vmatpush1.bf16.msra.mxu0 0
      %1499 = vmatprep.subr.bf16.mxu0 0
      %1500 = vmatpush1.bf16.msra.mxu0 0
      %1501 = vmatprep.subr.bf16.mxu0 0
      %1502 = vmatpush1.bf16.msra.mxu0 0
      %1503 = vmatprep.subr.bf16.mxu0 0
      %1504 = vmatpush1.bf16.msra.mxu0 0
      %1505 = vmatprep.subr.bf16.mxu0 0
      %1506 = vmatpush1.bf16.msra.mxu0 0
      %1507 = vmatprep.subr.bf16.mxu0 0
      %1508 = vmatpush1.bf16.msra.mxu0 0
      %1509 = vmatprep.mubr.bf16.mxu0 0
      %1510 = vmatmul.mubr.bf16.gmra.mrb[0].mxu0 %v1472
      %v1511 = vpop.f32.mrb[0].mxu0
      %v1512 = vadd.f32 0.0, %v1511
      %v1513 = vpop.f32.mrb[0].mxu0
      %v1514 = vpop.f32.mrb[0].mxu0
      %v1515 = vadd.f32 0.0, %v1514
      %v1516 = vpop.f32.mrb[0].mxu0
      %1517 = vmatprep.mubr.bf16.mxu0 0
      %1518 = vmatmul.mubr.bf16.gmra.mrb[0].mxu0 %v1475
      %v1519 = vpop.f32.mrb[0].mxu0
      %v1520 = vadd.f32 0.0, %v1519
      %v1521 = vpop.f32.mrb[0].mxu0
      %v1522 = vpop.f32.mrb[0].mxu0
      %v1523 = vadd.f32 0.0, %v1522
      %v1524 = vpop.f32.mrb[0].mxu0
      %1525 = vdwg.mxu0
      %v1538 = vunpack.c.l.b16 %v1410
      %v1539 = vunpack.c.l.b16 %v1411
      %v1540 = vunpack.c.l.b16 %v1412
      %v1541 = vunpack.c.l.b16 %v1413
      %v1542 = vunpack.c.l.b16 %v1414
      %v1543 = vunpack.c.l.b16 %v1415
      %v1544 = vunpack.c.l.b16 %v1416
      %v1545 = vunpack.c.l.b16 %v1417
      %v1546 = vunpack.c.l.b16 %v1418
      %v1547 = vunpack.c.l.b16 %v1419
      %v1548 = vunpack.c.l.b16 %v1420
      %v1549 = vunpack.c.l.b16 %v1421
      %v1550 = vpack.c.b16 %v1539, %v1538
      %v1551 = vpack.c.b16 %v1541, %v1540
      %v1552 = vpack.c.b16 %v1543, %v1542
      %v1553 = vpack.c.b16 %v1545, %v1544
      %v1554 = vpack.c.b16 %v1547, %v1546
      %v1555 = vpack.c.b16 %v1549, %v1548
      %1562 = vmatprep.subr.bf16.mxu0 0
      %1563 = vmatpush1.bf16.msra.mxu0 %v1550
      %1564 = vmatprep.subr.bf16.mxu0 0
      %1565 = vmatpush1.bf16.msra.mxu0 %v1551
      %1566 = vmatprep.subr.bf16.mxu0 0
      %1567 = vmatpush1.bf16.msra.mxu0 %v1552
      %1568 = vmatprep.subr.bf16.mxu0 0
      %1569 = vmatpush1.bf16.msra.mxu0 %v1553
      %1570 = vmatprep.subr.bf16.mxu0 0
      %1571 = vmatpush1.bf16.msra.mxu0 %v1554
      %1572 = vmatprep.subr.bf16.mxu0 0
      %1573 = vmatpush1.bf16.msra.mxu0 %v1555
      %1574 = vmatprep.subr.bf16.mxu0 0
      %1575 = vmatpush1.bf16.msra.mxu0 0
      %1576 = vmatprep.subr.bf16.mxu0 0
      %1577 = vmatpush1.bf16.msra.mxu0 0
      %1578 = vmatprep.subr.bf16.mxu0 0
      %1579 = vmatpush1.bf16.msra.mxu0 0
      %1580 = vmatprep.subr.bf16.mxu0 0
      %1581 = vmatpush1.bf16.msra.mxu0 0
      %1582 = vmatprep.subr.bf16.mxu0 0
      %1583 = vmatpush1.bf16.msra.mxu0 0
      %1584 = vmatprep.subr.bf16.mxu0 0
      %1585 = vmatpush1.bf16.msra.mxu0 0
      %1586 = vmatprep.subr.bf16.mxu0 0
      %1587 = vmatpush1.bf16.msra.mxu0 0
      %1588 = vmatprep.subr.bf16.mxu0 0
      %1589 = vmatpush1.bf16.msra.mxu0 0
      %1590 = vmatprep.subr.bf16.mxu0 0
      %1591 = vmatpush1.bf16.msra.mxu0 0
      %1592 = vmatprep.subr.bf16.mxu0 0
      %1593 = vmatpush1.bf16.msra.mxu0 0
      %1594 = vmatprep.mubr.bf16.mxu0 0
      %1595 = vmatmul.mubr.bf16.gmra.mrb[0].mxu0 %v1472
      %v1596 = vpop.f32.mrb[0].mxu0
      %v1597 = vadd.f32 %v1512, %v1596
      %v1598 = vpop.f32.mrb[0].mxu0
      %v1599 = vpop.f32.mrb[0].mxu0
      %v1600 = vadd.f32 %v1515, %v1599
      %v1601 = vpop.f32.mrb[0].mxu0
      %1602 = vmatprep.mubr.bf16.mxu0 0
      %1603 = vmatmul.mubr.bf16.gmra.mrb[0].mxu0 %v1475
      %v1604 = vpop.f32.mrb[0].mxu0
      %v1605 = vadd.f32 %v1520, %v1604
      %v1606 = vpop.f32.mrb[0].mxu0
      %v1607 = vpop.f32.mrb[0].mxu0
      %v1608 = vadd.f32 %v1523, %v1607
      %v1609 = vpop.f32.mrb[0].mxu0
      %1610 = vdwg.mxu0
      %v1611 = vld [vmem:[%s9] sm:$0x1]
      %v1613 = vlaneseq
      %v1614 = vshrl.u32 %v1613, 7
      %v1615 = vsub.s32 0, %v1614
      %v1616 = vrot.slane %v1611, %v1615
      %v1618 = vadd.f32 %v1597, %v1616
      %v1619 = vadd.f32 %v1600, %v1616
      %v1620 = vadd.f32 %v1605, %v1616
      %v1621 = vadd.f32 %v1608, %v1616
      %v1622 = vmax.f32 %v1618, 0.0
      %v1623 = vmax.f32 %v1619, 0.0
      %v1624 = vmax.f32 %v1620, 0.0
      %v1625 = vmax.f32 %v1621, 0.0
      %1626 = vrot.lane.b32.xlu0 %v1339, 32
      %v1627 = vpop.permute.xlu0 %1626
      %1628 = vrot.lane.b32.xlu0 %v1340, 32
      %v1629 = vpop.permute.xlu0 %1628
      %1630 = vrot.lane.b32.xlu0 %v1341, 32
      %v1631 = vpop.permute.xlu0 %1630
      %1632 = vrot.lane.b32.xlu0 %v1342, 32
      %v1633 = vpop.permute.xlu0 %1632
      %1642 = vrot.lane.b32.xlu0 %v1622, 64
      %v1643 = vpop.permute.xlu0 %1642
      %1644 = vrot.lane.b32.xlu0 %v1623, 64
      %v1645 = vpop.permute.xlu0 %1644
      %1646 = vrot.lane.b32.xlu0 %v1624, 64
      %v1647 = vpop.permute.xlu0 %1646
      %1648 = vrot.lane.b32.xlu0 %v1625, 64
      %v1649 = vpop.permute.xlu0 %1648
      %v1654 = vsel %vm1399, %v1012, %v1627
      %v1655 = vsel %vm1399, %v1014, %v1629
      %v1656 = vsel %vm1399, %v1016, %v1631
      %v1657 = vsel %vm1399, %v1018, %v1633
      %v1658 = vsel %vm1023, %v1654, %v1643
      %v1659 = vsel %vm1023, %v1655, %v1645
      %v1660 = vsel %vm1023, %v1656, %v1647
      %v1661 = vsel %vm1023, %v1657, %v1649
      %v1662 = vpack.c.bf16 %v1659, %v1658
      %v1663 = vpack.c.bf16 %v1661, %v1660
      %v1664 = vld [vmem:[%s10] sm:$0xff]
      %v1665 = vld [vmem:[%s10 + $0x8] sm:$0xff]
      %v1666 = vld [vmem:[%s10 + $0x10] sm:$0xff]
      %v1667 = vld [vmem:[%s10 + $0x18] sm:$0xff]
      %v1668 = vld [vmem:[%s10 + $0x20] sm:$0xff]
      %v1669 = vld [vmem:[%s10 + $0x28] sm:$0xff]
      %v1670 = vld [vmem:[%s10 + $0x30] sm:$0xff]
      %v1671 = vld [vmem:[%s10 + $0x38] sm:$0xff]
      %v1672 = vld [vmem:[%s10 + $0x40] sm:$0xff]
      %v1673 = vld [vmem:[%s10 + $0x48] sm:$0xff]
      %v1674 = vld [vmem:[%s10 + $0x50] sm:$0xff]
      %v1675 = vld [vmem:[%s10 + $0x58] sm:$0xff]
      %v1676 = vld [vmem:[%s11] sm:$0xff]
      %v1677 = vld [vmem:[%s11 + $0x8] sm:$0xff]
      %v1678 = vld [vmem:[%s11 + $0x10] sm:$0xff]
      %v1679 = vld [vmem:[%s11 + $0x18] sm:$0xff]
      %v1680 = vld [vmem:[%s11 + $0x20] sm:$0xff]
      %v1681 = vld [vmem:[%s11 + $0x28] sm:$0xff]
      %v1682 = vld [vmem:[%s11 + $0x30] sm:$0xff]
      %v1683 = vld [vmem:[%s11 + $0x38] sm:$0xff]
      %v1684 = vld [vmem:[%s11 + $0x40] sm:$0xff]
      %v1685 = vld [vmem:[%s11 + $0x48] sm:$0xff]
      %v1686 = vld [vmem:[%s11 + $0x50] sm:$0xff]
      %v1687 = vld [vmem:[%s11 + $0x58] sm:$0xff]
      %v1700 = vunpack.c.l.b16 %v1676
      %v1701 = vunpack.c.h.b16 %v1676
      %v1702 = vunpack.c.l.b16 %v1677
      %v1703 = vunpack.c.h.b16 %v1677
      %v1704 = vunpack.c.l.b16 %v1678
      %v1705 = vunpack.c.h.b16 %v1678
      %v1706 = vunpack.c.l.b16 %v1679
      %v1707 = vunpack.c.h.b16 %v1679
      %v1708 = vunpack.c.l.b16 %v1680
      %v1709 = vunpack.c.h.b16 %v1680
      %v1710 = vunpack.c.l.b16 %v1681
      %v1711 = vunpack.c.h.b16 %v1681
      %v1712 = vunpack.c.l.b16 %v1682
      %v1713 = vunpack.c.h.b16 %v1682
      %v1714 = vunpack.c.l.b16 %v1683
      %v1715 = vunpack.c.h.b16 %v1683
      %v1716 = vunpack.c.l.b16 %v1684
      %v1717 = vunpack.c.h.b16 %v1684
      %v1718 = vunpack.c.l.b16 %v1685
      %v1719 = vunpack.c.h.b16 %v1685
      %v1720 = vunpack.c.l.b16 %v1686
      %v1721 = vunpack.c.h.b16 %v1686
      %v1722 = vunpack.c.l.b16 %v1687
      %v1723 = vunpack.c.h.b16 %v1687
      %v1724 = vpack.c.b16 %v1702, %v1700
      %v1725 = vpack.c.b16 %v1703, %v1701
      %v1726 = vpack.c.b16 %v1706, %v1704
      %v1727 = vpack.c.b16 %v1707, %v1705
      %v1728 = vpack.c.b16 %v1710, %v1708
      %v1729 = vpack.c.b16 %v1711, %v1709
      %v1730 = vpack.c.b16 %v1714, %v1712
      %v1731 = vpack.c.b16 %v1715, %v1713
      %v1732 = vpack.c.b16 %v1718, %v1716
      %v1733 = vpack.c.b16 %v1719, %v1717
      %v1734 = vpack.c.b16 %v1722, %v1720
      %v1735 = vpack.c.b16 %v1723, %v1721
      %v1749 = vsel %vm1470, %v1662, 0
      %v1752 = vsel %vm1470, %v1663, 0
      %1754 = vmatprep.subr.bf16.mxu0 %v1725
      %1755 = vmatpush1.bf16.msra.mxu0 %v1724
      %1756 = vmatprep.subr.bf16.mxu0 %v1727
      %1757 = vmatpush1.bf16.msra.mxu0 %v1726
      %1758 = vmatprep.subr.bf16.mxu0 %v1729
      %1759 = vmatpush1.bf16.msra.mxu0 %v1728
      %1760 = vmatprep.subr.bf16.mxu0 %v1731
      %1761 = vmatpush1.bf16.msra.mxu0 %v1730
      %1762 = vmatprep.subr.bf16.mxu0 %v1733
      %1763 = vmatpush1.bf16.msra.mxu0 %v1732
      %1764 = vmatprep.subr.bf16.mxu0 %v1735
      %1765 = vmatpush1.bf16.msra.mxu0 %v1734
      %1766 = vmatprep.subr.bf16.mxu0 0
      %1767 = vmatpush1.bf16.msra.mxu0 0
      %1768 = vmatprep.subr.bf16.mxu0 0
      %1769 = vmatpush1.bf16.msra.mxu0 0
      %1770 = vmatprep.subr.bf16.mxu0 0
      %1771 = vmatpush1.bf16.msra.mxu0 0
      %1772 = vmatprep.subr.bf16.mxu0 0
      %1773 = vmatpush1.bf16.msra.mxu0 0
      %1774 = vmatprep.subr.bf16.mxu0 0
      %1775 = vmatpush1.bf16.msra.mxu0 0
      %1776 = vmatprep.subr.bf16.mxu0 0
      %1777 = vmatpush1.bf16.msra.mxu0 0
      %1778 = vmatprep.subr.bf16.mxu0 0
      %1779 = vmatpush1.bf16.msra.mxu0 0
      %1780 = vmatprep.subr.bf16.mxu0 0
      %1781 = vmatpush1.bf16.msra.mxu0 0
      %1782 = vmatprep.subr.bf16.mxu0 0
      %1783 = vmatpush1.bf16.msra.mxu0 0
      %1784 = vmatprep.subr.bf16.mxu0 0
      %1785 = vmatpush1.bf16.msra.mxu0 0
      %1786 = vmatprep.mubr.bf16.mxu0 0
      %1787 = vmatmul.mubr.bf16.gmra.mrb[0].mxu0 %v1749
      %v1788 = vpop.f32.mrb[0].mxu0
      %v1789 = vadd.f32 0.0, %v1788
      %v1790 = vpop.f32.mrb[0].mxu0
      %v1791 = vadd.f32 0.0, %v1790
      %v1792 = vpop.f32.mrb[0].mxu0
      %v1793 = vadd.f32 0.0, %v1792
      %v1794 = vpop.f32.mrb[0].mxu0
      %v1795 = vadd.f32 0.0, %v1794
      %1796 = vmatprep.mubr.bf16.mxu0 0
      %1797 = vmatmul.mubr.bf16.gmra.mrb[0].mxu0 %v1752
      %v1798 = vpop.f32.mrb[0].mxu0
      %v1799 = vadd.f32 0.0, %v1798
      %v1800 = vpop.f32.mrb[0].mxu0
      %v1801 = vadd.f32 0.0, %v1800
      %v1802 = vpop.f32.mrb[0].mxu0
      %v1803 = vadd.f32 0.0, %v1802
      %v1804 = vpop.f32.mrb[0].mxu0
      %v1805 = vadd.f32 0.0, %v1804
      %1806 = vdwg.mxu0
      %v1819 = vunpack.c.l.b16 %v1664
      %v1820 = vunpack.c.h.b16 %v1664
      %v1821 = vunpack.c.l.b16 %v1665
      %v1822 = vunpack.c.h.b16 %v1665
      %v1823 = vunpack.c.l.b16 %v1666
      %v1824 = vunpack.c.h.b16 %v1666
      %v1825 = vunpack.c.l.b16 %v1667
      %v1826 = vunpack.c.h.b16 %v1667
      %v1827 = vunpack.c.l.b16 %v1668
      %v1828 = vunpack.c.h.b16 %v1668
      %v1829 = vunpack.c.l.b16 %v1669
      %v1830 = vunpack.c.h.b16 %v1669
      %v1831 = vunpack.c.l.b16 %v1670
      %v1832 = vunpack.c.h.b16 %v1670
      %v1833 = vunpack.c.l.b16 %v1671
      %v1834 = vunpack.c.h.b16 %v1671
      %v1835 = vunpack.c.l.b16 %v1672
      %v1836 = vunpack.c.h.b16 %v1672
      %v1837 = vunpack.c.l.b16 %v1673
      %v1838 = vunpack.c.h.b16 %v1673
      %v1839 = vunpack.c.l.b16 %v1674
      %v1840 = vunpack.c.h.b16 %v1674
      %v1841 = vunpack.c.l.b16 %v1675
      %v1842 = vunpack.c.h.b16 %v1675
      %v1843 = vpack.c.b16 %v1821, %v1819
      %v1844 = vpack.c.b16 %v1822, %v1820
      %v1845 = vpack.c.b16 %v1825, %v1823
      %v1846 = vpack.c.b16 %v1826, %v1824
      %v1847 = vpack.c.b16 %v1829, %v1827
      %v1848 = vpack.c.b16 %v1830, %v1828
      %v1849 = vpack.c.b16 %v1833, %v1831
      %v1850 = vpack.c.b16 %v1834, %v1832
      %v1851 = vpack.c.b16 %v1837, %v1835
      %v1852 = vpack.c.b16 %v1838, %v1836
      %v1853 = vpack.c.b16 %v1841, %v1839
      %v1854 = vpack.c.b16 %v1842, %v1840
      %1867 = vmatprep.subr.bf16.mxu0 %v1844
      %1868 = vmatpush1.bf16.msra.mxu0 %v1843
      %1869 = vmatprep.subr.bf16.mxu0 %v1846
      %1870 = vmatpush1.bf16.msra.mxu0 %v1845
      %1871 = vmatprep.subr.bf16.mxu0 %v1848
      %1872 = vmatpush1.bf16.msra.mxu0 %v1847
      %1873 = vmatprep.subr.bf16.mxu0 %v1850
      %1874 = vmatpush1.bf16.msra.mxu0 %v1849
      %1875 = vmatprep.subr.bf16.mxu0 %v1852
      %1876 = vmatpush1.bf16.msra.mxu0 %v1851
      %1877 = vmatprep.subr.bf16.mxu0 %v1854
      %1878 = vmatpush1.bf16.msra.mxu0 %v1853
      %1879 = vmatprep.subr.bf16.mxu0 0
      %1880 = vmatpush1.bf16.msra.mxu0 0
      %1881 = vmatprep.subr.bf16.mxu0 0
      %1882 = vmatpush1.bf16.msra.mxu0 0
      %1883 = vmatprep.subr.bf16.mxu0 0
      %1884 = vmatpush1.bf16.msra.mxu0 0
      %1885 = vmatprep.subr.bf16.mxu0 0
      %1886 = vmatpush1.bf16.msra.mxu0 0
      %1887 = vmatprep.subr.bf16.mxu0 0
      %1888 = vmatpush1.bf16.msra.mxu0 0
      %1889 = vmatprep.subr.bf16.mxu0 0
      %1890 = vmatpush1.bf16.msra.mxu0 0
      %1891 = vmatprep.subr.bf16.mxu0 0
      %1892 = vmatpush1.bf16.msra.mxu0 0
      %1893 = vmatprep.subr.bf16.mxu0 0
      %1894 = vmatpush1.bf16.msra.mxu0 0
      %1895 = vmatprep.subr.bf16.mxu0 0
      %1896 = vmatpush1.bf16.msra.mxu0 0
      %1897 = vmatprep.subr.bf16.mxu0 0
      %1898 = vmatpush1.bf16.msra.mxu0 0
      %1899 = vmatprep.mubr.bf16.mxu0 0
      %1900 = vmatmul.mubr.bf16.gmra.mrb[0].mxu0 %v1749
      %v1901 = vpop.f32.mrb[0].mxu0
      %v1902 = vadd.f32 %v1789, %v1901
      %v1903 = vpop.f32.mrb[0].mxu0
      %v1904 = vadd.f32 %v1791, %v1903
      %v1905 = vpop.f32.mrb[0].mxu0
      %v1906 = vadd.f32 %v1793, %v1905
      %v1907 = vpop.f32.mrb[0].mxu0
      %v1908 = vadd.f32 %v1795, %v1907
      %1909 = vmatprep.mubr.bf16.mxu0 0
      %1910 = vmatmul.mubr.bf16.gmra.mrb[0].mxu0 %v1752
      %v1911 = vpop.f32.mrb[0].mxu0
      %v1912 = vadd.f32 %v1799, %v1911
      %v1913 = vpop.f32.mrb[0].mxu0
      %v1914 = vadd.f32 %v1801, %v1913
      %v1915 = vpop.f32.mrb[0].mxu0
      %v1916 = vadd.f32 %v1803, %v1915
      %v1917 = vpop.f32.mrb[0].mxu0
      %v1918 = vadd.f32 %v1805, %v1917
      %1919 = vdwg.mxu0
      %v1920 = vld [vmem:[%s12] sm:$0x3]
      %v1922 = vlaneseq
      %v1923 = vshrl.u32 %v1922, 7
      %v1924 = vsub.s32 0, %v1923
      %v1925 = vrot.slane %v1920, %v1924
      %v1926 = vlaneseq
      %v1927 = vshrl.u32 %v1926, 7
      %v1928 = vsub.s32 1, %v1927
      %v1929 = vrot.slane %v1920, %v1928
      %v1932 = vadd.f32 %v1902, %v1925
      %v1933 = vadd.f32 %v1904, %v1929
      %v1934 = vadd.f32 %v1906, %v1925
      %v1935 = vadd.f32 %v1908, %v1929
      %v1936 = vadd.f32 %v1912, %v1925
      %v1937 = vadd.f32 %v1914, %v1929
      %v1938 = vadd.f32 %v1916, %v1925
      %v1939 = vadd.f32 %v1918, %v1929
      %v1940 = vadd.f32 %v450, %v1932
      %v1941 = vadd.f32 %v451, %v1933
      %v1942 = vadd.f32 %v452, %v1934
      %v1943 = vadd.f32 %v453, %v1935
      %v1944 = vadd.f32 %v454, %v1936
      %v1945 = vadd.f32 %v455, %v1937
      %v1946 = vadd.f32 %v456, %v1938
      %v1947 = vadd.f32 %v457, %v1939
      %v1948 = vmax.f32 %v1940, 0.0
      %v1949 = vmax.f32 %v1941, 0.0
      %v1950 = vmax.f32 %v1942, 0.0
      %v1951 = vmax.f32 %v1943, 0.0
      %v1952 = vmax.f32 %v1944, 0.0
      %v1953 = vmax.f32 %v1945, 0.0
      %v1954 = vmax.f32 %v1946, 0.0
      %v1955 = vmax.f32 %v1947, 0.0
      %1956 = vst [vmem:[%s447] sm:$0xff] %v1948
      %1957 = vst [vmem:[%s447 + $0x8] sm:$0xff] %v1949
      %1958 = vst [vmem:[%s447 + $0x10] sm:$0xff] %v1950
      %1959 = vst [vmem:[%s447 + $0x18] sm:$0xff] %v1951
      %1960 = vst [vmem:[%s447 + $0x20] sm:$0xff] %v1952
      %1961 = vst [vmem:[%s447 + $0x28] sm:$0xff] %v1953
      %1962 = vst [vmem:[%s447 + $0x30] sm:$0xff] %v1954
      %1963 = vst [vmem:[%s447 + $0x38] sm:$0xff] %v1955
      %s1964 = smul.u32 4, %s24
      %p1965 = scmp.lt.s32.totalorder %s1964, 15
      %s1966 = scalar_select %p1965, %s1964, 15
      %s1967 = smul.addr %s1966, 2
      %s1968 = smul.addr %s1967, 8
      %s1969 = scalar_lea.vmem %s13, %s1968
      // Predicated region
      $region73: #{category_forward.1} parent=71 // pred_check
        %p1970 = pneg %p320
      $region74: #{category_forward.1} parent=71 // pred_check_branch
        %1972 = sbr.rel (%p1970) target = $region76
      $region75: #{category_forward.1} parent=71 // pred_region
        %s1973 = smul.u32 4, %s24
      $region76: #{category_forward.1} parent=71 // pred_fallthru
        _
    $region72: #{category_forward.1} parent=5 // pred_fallthru
      _
    %p1974 = scmp.le.s32.totalorder 2, %s19
    // Predicated region
    $region77: #{category_forward.1} parent=5 // pred_check
      %p1975 = pneg %p1974
    $region78: #{category_forward.1} parent=5 // pred_check_branch
      %1977 = sbr.rel (%p1975) target = $region80
    $region79: #{category_forward.1} parent=5 // pred_region
      %s1978 = ssub.s32 %s19, 2
      // Predicated region
      $region81: #{category_forward.1} parent=79 // pred_check
        %p1979 = pneg %p326
      $region82: #{category_forward.1} parent=79 // pred_check_branch
        %1981 = sbr.rel (%p1979) target = $region84
      $region83: #{category_forward.1} parent=79 // pred_region
        %s1982 = smul.u32 4, %s25
        %p1983 = scmp.lt.s32.totalorder %s1982, 15
        %s1984 = scalar_select %p1983, %s1982, 15
        %s1985 = smul.addr %s1984, 2
        %s1986 = smul.addr %s1985, 8
        %s1987 = scalar_lea.vmem %s13, %s1986
      $region84: #{category_forward.1} parent=79 // pred_fallthru
        _
    $region80: #{category_forward.1} parent=5 // pred_fallthru
      _
  $region6: #{category_forward.1} parent=0 // loop_footer
    %s23 = sadd.s32 1, %s19
  $region7: #{category_forward.1} parent=0 // loop_footer_branch
    %18 = sbr.rel target = $region3
  $region8: #{category_forward.1} parent=0 // loop_exit
    _

</llo_original>
